<compile_context>
chip_gen: v5e
topology: v5e:2x2
jax: 0.10.0
libtpu: 0.0.40
codegen_flags: <defaults>
</compile_context>

<pallas_src>
import jax
import jax.numpy as jnp
from jax import lax
from jax.experimental import pallas as pl
from jax.experimental.pallas import tpu as pltpu

# ----------------------------- synthetic config -----------------------------
VOCAB = 100
MAX_POS = 16
BATCH = 2
SEQ = 8
HIDDEN = 32
HEADS = 2
HEAD_DIM = HIDDEN // HEADS
INTER = 64
LAYERS = 2
NUM_ACT = 8          # len(act['esc']) — ESConv has 8 dialogue strategies
LN_EPS = 1e-12
ATTN_SCALE = 1.0 / float(HEAD_DIM) ** 0.5
TOKENS = BATCH * SEQ


# ------------------------------ fused Pallas kernel ------------------------------
def _ln(x, g, b):
    mean = jnp.mean(x, axis=-1, keepdims=True)
    var = jnp.mean(jnp.square(x - mean), axis=-1, keepdims=True)
    return (x - mean) * lax.rsqrt(var + LN_EPS) * g + b


def _fused_forward_kernel(
    emb_ref, bias_ref, eg_ref, eb_ref,
    wq_ref, wk_ref, wv_ref, bq_ref, bk_ref, bv_ref,
    wo_ref, bo_ref, ln1g_ref, ln1b_ref,
    wi_ref, bi_ref, wd_ref, bd_ref, ln2g_ref, ln2b_ref,
    wp_ref, bp_ref, wc_ref, bc_ref,
    logits_ref, probs_ref,
):
    # embeddings LayerNorm; activations are token-major (B*S, HIDDEN), VMEM-resident, f32
    x = _ln(emb_ref[...].astype(jnp.float32), eg_ref[...], eb_ref[...])
    bias = bias_ref[...]                     # (T, T) block-diag batch + key-padding mask

    # ------- transformer layers (statically unrolled, all weights already in VMEM) -------
    for l in range(LAYERS):
        xb = x.astype(jnp.bfloat16)          # bf16 matmul operands, f32 accumulate

        ctx_heads = []
        for h in range(HEADS):               # 2 static iterations; batch fully vectorized
            q_h = jnp.dot(xb, wq_ref[l, h], preferred_element_type=jnp.float32) + bq_ref[l, h]
            k_h = jnp.dot(xb, wk_ref[l, h], preferred_element_type=jnp.float32) + bk_ref[l, h]
            v_h = jnp.dot(xb, wv_ref[l, h], preferred_element_type=jnp.float32) + bv_ref[l, h]
            # one (T,Dh)x(Dh,T) score matmul for ALL batch rows; block-diagonal mask
            s = lax.dot_general(q_h.astype(jnp.bfloat16), k_h.astype(jnp.bfloat16),
                                (((1,), (1,)), ((), ())),
                                preferred_element_type=jnp.float32)
            s = s * ATTN_SCALE + bias
            m = jnp.max(s, axis=-1, keepdims=True)
            p = jnp.exp(s - m)
            p = p * pl.reciprocal(jnp.sum(p, axis=-1, keepdims=True), approx=True)
            ctx_heads.append(
                jnp.dot(p.astype(jnp.bfloat16), v_h.astype(jnp.bfloat16),
                        preferred_element_type=jnp.float32))

        ctx = jnp.concatenate(ctx_heads, axis=-1)              # (T, H)
        attn_out = jnp.dot(ctx.astype(jnp.bfloat16), wo_ref[l],
                           preferred_element_type=jnp.float32) + bo_ref[l]
        x = _ln(x + attn_out, ln1g_ref[l], ln1b_ref[l])

        inter = jax.nn.gelu(
            jnp.dot(x.astype(jnp.bfloat16), wi_ref[l],
                    preferred_element_type=jnp.float32) + bi_ref[l])
        ffn = jnp.dot(inter.astype(jnp.bfloat16), wd_ref[l],
                      preferred_element_type=jnp.float32) + bd_ref[l]
        x = _ln(x + ffn, ln2g_ref[l], ln2b_ref[l])

    # ------- fused pooler + classifier + softmax (all batch rows at once) -------
    cls_rows = jnp.concatenate([x[b * SEQ:b * SEQ + 1, :] for b in range(BATCH)], axis=0)
    pooled = jnp.tanh(jnp.dot(cls_rows.astype(jnp.bfloat16), wp_ref[...],
                              preferred_element_type=jnp.float32) + bp_ref[...])
    # dropout(pooled_output): eval-mode identity
    logits = jnp.dot(pooled.astype(jnp.bfloat16), wc_ref[...],
                     preferred_element_type=jnp.float32) + bc_ref[...]       # (B, A)
    logits_ref[...] = logits.astype(logits_ref.dtype)
    m = jnp.max(logits, axis=-1, keepdims=True)
    e = jnp.exp(logits - m)
    probs = e * pl.reciprocal(jnp.sum(e, axis=-1, keepdims=True), approx=True)
    probs_ref[...] = probs.astype(probs_ref.dtype)


def _full_spec(a):
    zeros = (0,) * a.ndim
    return pl.BlockSpec(a.shape, lambda i, _z=zeros: _z)


def fused_forward(emb, attn_bias, p):
    """One pallas_call for the entire encoder + pooler + classifier + softmax."""
    args = (emb, attn_bias, p["emb_ln_g"], p["emb_ln_b"],
            p["wq"], p["wk"], p["wv"], p["bq"], p["bk"], p["bv"],
            p["wo"], p["bo"], p["ln1_g"], p["ln1_b"],
            p["wi"], p["bi"], p["wd"], p["bd"], p["ln2_g"], p["ln2_b"],
            p["wp"], p["bp"], p["wc"], p["bc"])
    out_shape = (jax.ShapeDtypeStruct((BATCH, NUM_ACT), jnp.float32),
                 jax.ShapeDtypeStruct((BATCH, NUM_ACT), jnp.float32))
    out_specs = (pl.BlockSpec((BATCH, NUM_ACT), lambda i: (0, 0)),
                 pl.BlockSpec((BATCH, NUM_ACT), lambda i: (0, 0)))
    # grid=(1,): single TC program; at real batch sizes add a "parallel" batch
    # axis so v7x's 2 TensorCores shard the work.
    return pl.pallas_call(
        _fused_forward_kernel,
        out_shape=out_shape,
        grid=(1,),
        in_specs=[_full_spec(a) for a in args],
        out_specs=out_specs,
        compiler_params=pltpu.CompilerParams(dimension_semantics=("arbitrary",)),
    )(*args)


# ----------------------------- parameter setup ------------------------------
def init_params(key):
    def nrm(k, shape, scale=0.02):
        return (scale * jax.random.normal(k, shape)).astype(jnp.float32)

    def per_head(w):      # (H, H) -> (HEADS, H, HEAD_DIM); head h = output cols [h*Dh:(h+1)*Dh]
        return w.reshape(HIDDEN, HEADS, HEAD_DIM).transpose(1, 0, 2)

    keys = jax.random.split(key, 6)
    p = {
        "word_emb": nrm(keys[0], (VOCAB, HIDDEN)),
        "pos_emb": nrm(keys[1], (MAX_POS, HIDDEN)),
        "type_emb": nrm(keys[2], (2, HIDDEN)),
        "emb_ln_g": jnp.ones((1, HIDDEN), jnp.float32),
        "emb_ln_b": jnp.zeros((1, HIDDEN), jnp.float32),
        "wp": nrm(keys[3], (HIDDEN, HIDDEN)).astype(jnp.bfloat16),   # pooler
        "bp": jnp.zeros((1, HIDDEN), jnp.float32),
        "wc": nrm(keys[4], (HIDDEN, NUM_ACT)).astype(jnp.bfloat16),  # nn.Linear(hidden, len(act))
        "bc": jnp.zeros((1, NUM_ACT), jnp.float32),
    }
    lkeys = jax.random.split(keys[5], LAYERS)
    wq, wk, wv, wo, wi, wd = [], [], [], [], [], []
    for l in range(LAYERS):
        k = jax.random.split(lkeys[l], 6)
        wq.append(per_head(nrm(k[0], (HIDDEN, HIDDEN))))
        wk.append(per_head(nrm(k[1], (HIDDEN, HIDDEN))))
        wv.append(per_head(nrm(k[2], (HIDDEN, HIDDEN))))
        wo.append(nrm(k[3], (HIDDEN, HIDDEN)))
        wi.append(nrm(k[4], (HIDDEN, INTER)))
        wd.append(nrm(k[5], (INTER, HIDDEN)))
    p["wq"] = jnp.stack(wq).astype(jnp.bfloat16)                     # (L, HEADS, H, Dh)
    p["wk"] = jnp.stack(wk).astype(jnp.bfloat16)
    p["wv"] = jnp.stack(wv).astype(jnp.bfloat16)
    p["bq"] = jnp.zeros((LAYERS, HEADS, 1, HEAD_DIM), jnp.float32)
    p["bk"] = jnp.zeros((LAYERS, HEADS, 1, HEAD_DIM), jnp.float32)
    p["bv"] = jnp.zeros((LAYERS, HEADS, 1, HEAD_DIM), jnp.float32)
    p["wo"] = jnp.stack(wo).astype(jnp.bfloat16)                     # (L, H, H)
    p["bo"] = jnp.zeros((LAYERS, 1, HIDDEN), jnp.float32)
    p["ln1_g"] = jnp.ones((LAYERS, 1, HIDDEN), jnp.float32)
    p["ln1_b"] = jnp.zeros((LAYERS, 1, HIDDEN), jnp.float32)
    p["wi"] = jnp.stack(wi).astype(jnp.bfloat16)                     # (L, H, INTER)
    p["bi"] = jnp.zeros((LAYERS, 1, INTER), jnp.float32)
    p["wd"] = jnp.stack(wd).astype(jnp.bfloat16)                     # (L, INTER, H)
    p["bd"] = jnp.zeros((LAYERS, 1, HIDDEN), jnp.float32)
    p["ln2_g"] = jnp.ones((LAYERS, 1, HIDDEN), jnp.float32)
    p["ln2_b"] = jnp.zeros((LAYERS, 1, HIDDEN), jnp.float32)
    return p


# ------------------------------- forward pass -------------------------------
def ppdpp_forward(params, input_ids, attention_mask, labels=None):
    B, S = input_ids.shape

    # embedding table lookups are gather glue (host-side JAX); everything else is in-kernel
    emb = (params["word_emb"][input_ids]
           + params["pos_emb"][jnp.arange(S)][None, :, :]
           + params["type_emb"][0][None, None, :])
    emb = emb.reshape(B * S, HIDDEN).astype(jnp.float32)

    # (B*S, B*S) additive attention bias: 0 where query & key are in the same batch row
    # and the key is unmasked, -1e9 otherwise (block-diagonal over batches).
    tok_batch = jnp.repeat(jnp.arange(B), S)
    key_valid = attention_mask.reshape(-1) == 1
    ok = (tok_batch[:, None] == tok_batch[None, :]) & key_valid[None, :]
    attn_bias = jnp.where(ok, 0.0, -1e9).astype(jnp.float32)

    logits, probs = fused_forward(emb, attn_bias, params)

    if labels is not None:
        # CrossEntropyLoss(logits.view(-1, A), labels.view(-1)) from Pallas-produced logits
        logz = jax.nn.logsumexp(logits, axis=-1)
        picked = jnp.take_along_axis(logits, labels.reshape(-1, 1), axis=-1)[:, 0]
        return jnp.mean(logz - picked)
    return probs


# ----------------------------------- main ------------------------------------
if __name__ == "__main__":
    key = jax.random.PRNGKey(0)
    pkey, dkey = jax.random.split(key)
    params = init_params(pkey)

    input_ids = jax.random.randint(dkey, (BATCH, SEQ), 0, VOCAB, dtype=jnp.int32)
    attention_mask = jnp.array(
        [[1, 1, 1, 1, 1, 1, 1, 1],
         [1, 1, 1, 1, 1, 0, 0, 0]], dtype=jnp.int32)

    probs = ppdpp_forward(params, input_ids, attention_mask, labels=None)
    probs = jax.block_until_ready(probs)

    labels = jnp.array([0, 3], dtype=jnp.int32)
    loss = jax.block_until_ready(
        ppdpp_forward(params, input_ids, attention_mask, labels=labels))

    assert probs.shape == (BATCH, NUM_ACT)
    assert bool(jnp.all(jnp.isfinite(probs)))
    # approx-reciprocal softmax: allow small normalization slack
    assert bool(jnp.allclose(jnp.sum(probs, axis=-1), 1.0, atol=1e-2))
    assert bool(jnp.isfinite(loss))
    print("KERNEL_OK")
</pallas_src>

<mosaic_0001>
module attributes {stable_mosaic.version = 11 : i64} {
  func.func @_fused_forward_kernel(%arg0: i32, %arg1: memref<16x32xf32, #tpu.memory_space<vmem>>, %arg2: memref<16x16xf32, #tpu.memory_space<vmem>>, %arg3: memref<1x32xf32, #tpu.memory_space<vmem>>, %arg4: memref<1x32xf32, #tpu.memory_space<vmem>>, %arg5: memref<2x2x32x16xbf16, #tpu.memory_space<vmem>>, %arg6: memref<2x2x32x16xbf16, #tpu.memory_space<vmem>>, %arg7: memref<2x2x32x16xbf16, #tpu.memory_space<vmem>>, %arg8: memref<2x2x1x16xf32, #tpu.memory_space<vmem>>, %arg9: memref<2x2x1x16xf32, #tpu.memory_space<vmem>>, %arg10: memref<2x2x1x16xf32, #tpu.memory_space<vmem>>, %arg11: memref<2x32x32xbf16, #tpu.memory_space<vmem>>, %arg12: memref<2x1x32xf32, #tpu.memory_space<vmem>>, %arg13: memref<2x1x32xf32, #tpu.memory_space<vmem>>, %arg14: memref<2x1x32xf32, #tpu.memory_space<vmem>>, %arg15: memref<2x32x64xbf16, #tpu.memory_space<vmem>>, %arg16: memref<2x1x64xf32, #tpu.memory_space<vmem>>, %arg17: memref<2x64x32xbf16, #tpu.memory_space<vmem>>, %arg18: memref<2x1x32xf32, #tpu.memory_space<vmem>>, %arg19: memref<2x1x32xf32, #tpu.memory_space<vmem>>, %arg20: memref<2x1x32xf32, #tpu.memory_space<vmem>>, %arg21: memref<32x32xbf16, #tpu.memory_space<vmem>>, %arg22: memref<1x32xf32, #tpu.memory_space<vmem>>, %arg23: memref<32x8xbf16, #tpu.memory_space<vmem>>, %arg24: memref<1x8xf32, #tpu.memory_space<vmem>>, %arg25: memref<2x8xf32, #tpu.memory_space<vmem>>, %arg26: memref<2x8xf32, #tpu.memory_space<vmem>>) attributes {dimension_semantics = [#tpu.dimension_semantics<arbitrary>], iteration_bounds = array<i64: 1>, scalar_prefetch = 0 : i64, scratch_operands = 0 : i64, tpu.core_type = #tpu.core_type<tc>, window_params = [{pipeline_mode = #tpu.pipeline_mode<synchronous>, transform_indices = @transform_0, window_bounds = array<i64: 16, 32>}, {pipeline_mode = #tpu.pipeline_mode<synchronous>, transform_indices = @transform_1, window_bounds = array<i64: 16, 16>}, {pipeline_mode = #tpu.pipeline_mode<synchronous>, transform_indices = @transform_2, window_bounds = array<i64: 1, 32>}, {pipeline_mode = #tpu.pipeline_mode<synchronous>, transform_indices = @transform_3, window_bounds = array<i64: 1, 32>}, {pipeline_mode = #tpu.pipeline_mode<synchronous>, transform_indices = @transform_4, window_bounds = array<i64: 2, 2, 32, 16>}, {pipeline_mode = #tpu.pipeline_mode<synchronous>, transform_indices = @transform_5, window_bounds = array<i64: 2, 2, 32, 16>}, {pipeline_mode = #tpu.pipeline_mode<synchronous>, transform_indices = @transform_6, window_bounds = array<i64: 2, 2, 32, 16>}, {pipeline_mode = #tpu.pipeline_mode<synchronous>, transform_indices = @transform_7, window_bounds = array<i64: 2, 2, 1, 16>}, {pipeline_mode = #tpu.pipeline_mode<synchronous>, transform_indices = @transform_8, window_bounds = array<i64: 2, 2, 1, 16>}, {pipeline_mode = #tpu.pipeline_mode<synchronous>, transform_indices = @transform_9, window_bounds = array<i64: 2, 2, 1, 16>}, {pipeline_mode = #tpu.pipeline_mode<synchronous>, transform_indices = @transform_10, window_bounds = array<i64: 2, 32, 32>}, {pipeline_mode = #tpu.pipeline_mode<synchronous>, transform_indices = @transform_11, window_bounds = array<i64: 2, 1, 32>}, {pipeline_mode = #tpu.pipeline_mode<synchronous>, transform_indices = @transform_12, window_bounds = array<i64: 2, 1, 32>}, {pipeline_mode = #tpu.pipeline_mode<synchronous>, transform_indices = @transform_13, window_bounds = array<i64: 2, 1, 32>}, {pipeline_mode = #tpu.pipeline_mode<synchronous>, transform_indices = @transform_14, window_bounds = array<i64: 2, 32, 64>}, {pipeline_mode = #tpu.pipeline_mode<synchronous>, transform_indices = @transform_15, window_bounds = array<i64: 2, 1, 64>}, {pipeline_mode = #tpu.pipeline_mode<synchronous>, transform_indices = @transform_16, window_bounds = array<i64: 2, 64, 32>}, {pipeline_mode = #tpu.pipeline_mode<synchronous>, transform_indices = @transform_17, window_bounds = array<i64: 2, 1, 32>}, {pipeline_mode = #tpu.pipeline_mode<synchronous>, transform_indices = @transform_18, window_bounds = array<i64: 2, 1, 32>}, {pipeline_mode = #tpu.pipeline_mode<synchronous>, transform_indices = @transform_19, window_bounds = array<i64: 2, 1, 32>}, {pipeline_mode = #tpu.pipeline_mode<synchronous>, transform_indices = @transform_20, window_bounds = array<i64: 32, 32>}, {pipeline_mode = #tpu.pipeline_mode<synchronous>, transform_indices = @transform_21, window_bounds = array<i64: 1, 32>}, {pipeline_mode = #tpu.pipeline_mode<synchronous>, transform_indices = @transform_22, window_bounds = array<i64: 32, 8>}, {pipeline_mode = #tpu.pipeline_mode<synchronous>, transform_indices = @transform_23, window_bounds = array<i64: 1, 8>}, {pipeline_mode = #tpu.pipeline_mode<synchronous>, transform_indices = @transform_24, window_bounds = array<i64: 2, 8>}, {pipeline_mode = #tpu.pipeline_mode<synchronous>, transform_indices = @transform_25, window_bounds = array<i64: 2, 8>}]} {
    %c0 = arith.constant 0 : index
    %c0_0 = arith.constant 0 : index
    %0 = vector.load %arg1[%c0, %c0_0] : memref<16x32xf32, #tpu.memory_space<vmem>>, vector<16x32xf32>
    %c0_1 = arith.constant 0 : index
    %c0_2 = arith.constant 0 : index
    %1 = vector.load %arg3[%c0_1, %c0_2] : memref<1x32xf32, #tpu.memory_space<vmem>>, vector<1x32xf32>
    %c0_3 = arith.constant 0 : index
    %c0_4 = arith.constant 0 : index
    %2 = vector.load %arg4[%c0_3, %c0_4] : memref<1x32xf32, #tpu.memory_space<vmem>>, vector<1x32xf32>
    %cst = arith.constant dense<0.000000e+00> : vector<16xf32>
    %3 = vector.multi_reduction <add>, %0, %cst [1] : vector<16x32xf32> to vector<16xf32>
    %4 = vector.shape_cast %3 : vector<16xf32> to vector<16x1xf32>
    %cst_5 = arith.constant 3.200000e+01 : f32
    %5 = vector.broadcast %cst_5 : f32 to vector<16x1xf32>
    %6 = arith.divf %4, %5 : vector<16x1xf32>
    %7 = vector.broadcast %6 : vector<16x1xf32> to vector<16x32xf32>
    %8 = arith.subf %0, %7 : vector<16x32xf32>
    %9 = arith.mulf %8, %8 : vector<16x32xf32>
    %cst_6 = arith.constant dense<0.000000e+00> : vector<16xf32>
    %10 = vector.multi_reduction <add>, %9, %cst_6 [1] : vector<16x32xf32> to vector<16xf32>
    %11 = vector.shape_cast %10 : vector<16xf32> to vector<16x1xf32>
    %cst_7 = arith.constant 3.200000e+01 : f32
    %12 = vector.broadcast %cst_7 : f32 to vector<16x1xf32>
    %13 = arith.divf %11, %12 : vector<16x1xf32>
    %14 = vector.broadcast %6 : vector<16x1xf32> to vector<16x32xf32>
    %15 = arith.subf %0, %14 : vector<16x32xf32>
    %cst_8 = arith.constant 9.99999996E-13 : f32
    %16 = vector.broadcast %cst_8 : f32 to vector<16x1xf32>
    %17 = arith.addf %13, %16 : vector<16x1xf32>
    %18 = math.rsqrt %17 : vector<16x1xf32>
    %19 = vector.broadcast %18 : vector<16x1xf32> to vector<16x32xf32>
    %20 = arith.mulf %15, %19 : vector<16x32xf32>
    %21 = vector.broadcast %1 : vector<1x32xf32> to vector<16x32xf32>
    %22 = arith.mulf %20, %21 : vector<16x32xf32>
    %23 = vector.broadcast %2 : vector<1x32xf32> to vector<16x32xf32>
    %24 = arith.addf %22, %23 : vector<16x32xf32>
    %c0_9 = arith.constant 0 : index
    %c0_10 = arith.constant 0 : index
    %25 = vector.load %arg2[%c0_9, %c0_10] : memref<16x16xf32, #tpu.memory_space<vmem>>, vector<16x16xf32>
    %26 = arith.truncf %24 : vector<16x32xf32> to vector<16x32xbf16>
    %c0_11 = arith.constant 0 : index
    %c0_12 = arith.constant 0 : index
    %c0_13 = arith.constant 0 : index
    %c0_14 = arith.constant 0 : index
    %27 = vector.load %arg5[%c0_11, %c0_12, %c0_13, %c0_14] : memref<2x2x32x16xbf16, #tpu.memory_space<vmem>>, vector<1x1x32x16xbf16>
    %28 = vector.shape_cast %27 : vector<1x1x32x16xbf16> to vector<32x16xbf16>
    %cst_15 = arith.constant dense<0.000000e+00> : vector<16x16xf32>
    %29 = tpu.matmul %26, %28, %cst_15 {dimension_numbers = #tpu.dot_dimension_numbers<[1], [0], [0], [1], [0, 0, 1, 1], [], []>} : vector<16x32xbf16>, vector<32x16xbf16>, vector<16x16xf32> -> vector<16x16xf32>
    %c0_16 = arith.constant 0 : index
    %c0_17 = arith.constant 0 : index
    %c0_18 = arith.constant 0 : index
    %c0_19 = arith.constant 0 : index
    %30 = vector.load %arg8[%c0_16, %c0_17, %c0_18, %c0_19] : memref<2x2x1x16xf32, #tpu.memory_space<vmem>>, vector<1x1x1x16xf32>
    %31 = vector.shape_cast %30 : vector<1x1x1x16xf32> to vector<1x16xf32>
    %32 = vector.broadcast %31 : vector<1x16xf32> to vector<16x16xf32>
    %33 = arith.addf %29, %32 : vector<16x16xf32>
    %c0_20 = arith.constant 0 : index
    %c0_21 = arith.constant 0 : index
    %c0_22 = arith.constant 0 : index
    %c0_23 = arith.constant 0 : index
    %34 = vector.load %arg6[%c0_20, %c0_21, %c0_22, %c0_23] : memref<2x2x32x16xbf16, #tpu.memory_space<vmem>>, vector<1x1x32x16xbf16>
    %35 = vector.shape_cast %34 : vector<1x1x32x16xbf16> to vector<32x16xbf16>
    %cst_24 = arith.constant dense<0.000000e+00> : vector<16x16xf32>
    %36 = tpu.matmul %26, %35, %cst_24 {dimension_numbers = #tpu.dot_dimension_numbers<[1], [0], [0], [1], [0, 0, 1, 1], [], []>} : vector<16x32xbf16>, vector<32x16xbf16>, vector<16x16xf32> -> vector<16x16xf32>
    %c0_25 = arith.constant 0 : index
    %c0_26 = arith.constant 0 : index
    %c0_27 = arith.constant 0 : index
    %c0_28 = arith.constant 0 : index
    %37 = vector.load %arg9[%c0_25, %c0_26, %c0_27, %c0_28] : memref<2x2x1x16xf32, #tpu.memory_space<vmem>>, vector<1x1x1x16xf32>
    %38 = vector.shape_cast %37 : vector<1x1x1x16xf32> to vector<1x16xf32>
    %39 = vector.broadcast %38 : vector<1x16xf32> to vector<16x16xf32>
    %40 = arith.addf %36, %39 : vector<16x16xf32>
    %c0_29 = arith.constant 0 : index
    %c0_30 = arith.constant 0 : index
    %c0_31 = arith.constant 0 : index
    %c0_32 = arith.constant 0 : index
    %41 = vector.load %arg7[%c0_29, %c0_30, %c0_31, %c0_32] : memref<2x2x32x16xbf16, #tpu.memory_space<vmem>>, vector<1x1x32x16xbf16>
    %42 = vector.shape_cast %41 : vector<1x1x32x16xbf16> to vector<32x16xbf16>
    %cst_33 = arith.constant dense<0.000000e+00> : vector<16x16xf32>
    %43 = tpu.matmul %26, %42, %cst_33 {dimension_numbers = #tpu.dot_dimension_numbers<[1], [0], [0], [1], [0, 0, 1, 1], [], []>} : vector<16x32xbf16>, vector<32x16xbf16>, vector<16x16xf32> -> vector<16x16xf32>
    %c0_34 = arith.constant 0 : index
    %c0_35 = arith.constant 0 : index
    %c0_36 = arith.constant 0 : index
    %c0_37 = arith.constant 0 : index
    %44 = vector.load %arg10[%c0_34, %c0_35, %c0_36, %c0_37] : memref<2x2x1x16xf32, #tpu.memory_space<vmem>>, vector<1x1x1x16xf32>
    %45 = vector.shape_cast %44 : vector<1x1x1x16xf32> to vector<1x16xf32>
    %46 = vector.broadcast %45 : vector<1x16xf32> to vector<16x16xf32>
    %47 = arith.addf %43, %46 : vector<16x16xf32>
    %48 = arith.truncf %33 : vector<16x16xf32> to vector<16x16xbf16>
    %49 = arith.truncf %40 : vector<16x16xf32> to vector<16x16xbf16>
    %cst_38 = arith.constant dense<0.000000e+00> : vector<16x16xf32>
    %50 = tpu.matmul %48, %49, %cst_38 {dimension_numbers = #tpu.dot_dimension_numbers<[1], [1], [0], [0], [0, 0, 1, 0], [], []>} : vector<16x16xbf16>, vector<16x16xbf16>, vector<16x16xf32> -> vector<16x16xf32>
    %cst_39 = arith.constant 2.500000e-01 : f32
    %51 = vector.broadcast %cst_39 : f32 to vector<16x16xf32>
    %52 = arith.mulf %50, %51 : vector<16x16xf32>
    %53 = arith.addf %52, %25 : vector<16x16xf32>
    %cst_40 = arith.constant dense<0xFF800000> : vector<16xf32>
    %54 = vector.multi_reduction <maximumf>, %53, %cst_40 [1] : vector<16x16xf32> to vector<16xf32>
    %55 = vector.shape_cast %54 : vector<16xf32> to vector<16x1xf32>
    %56 = vector.broadcast %55 : vector<16x1xf32> to vector<16x16xf32>
    %57 = arith.subf %53, %56 : vector<16x16xf32>
    %58 = math.exp %57 : vector<16x16xf32>
    %cst_41 = arith.constant dense<0.000000e+00> : vector<16xf32>
    %59 = vector.multi_reduction <add>, %58, %cst_41 [1] : vector<16x16xf32> to vector<16xf32>
    %60 = vector.shape_cast %59 : vector<16xf32> to vector<16x1xf32>
    %61 = tpu.reciprocal %60 {approx = true} : vector<16x1xf32> -> vector<16x1xf32>
    %62 = vector.broadcast %61 : vector<16x1xf32> to vector<16x16xf32>
    %63 = arith.mulf %58, %62 : vector<16x16xf32>
    %64 = arith.truncf %63 : vector<16x16xf32> to vector<16x16xbf16>
    %65 = arith.truncf %47 : vector<16x16xf32> to vector<16x16xbf16>
    %cst_42 = arith.constant dense<0.000000e+00> : vector<16x16xf32>
    %66 = tpu.matmul %64, %65, %cst_42 {dimension_numbers = #tpu.dot_dimension_numbers<[1], [0], [0], [1], [0, 0, 1, 1], [], []>} : vector<16x16xbf16>, vector<16x16xbf16>, vector<16x16xf32> -> vector<16x16xf32>
    %c0_43 = arith.constant 0 : index
    %c1 = arith.constant 1 : index
    %c0_44 = arith.constant 0 : index
    %c0_45 = arith.constant 0 : index
    %67 = vector.load %arg5[%c0_43, %c1, %c0_44, %c0_45] : memref<2x2x32x16xbf16, #tpu.memory_space<vmem>>, vector<1x1x32x16xbf16>
    %68 = vector.shape_cast %67 : vector<1x1x32x16xbf16> to vector<32x16xbf16>
    %cst_46 = arith.constant dense<0.000000e+00> : vector<16x16xf32>
    %69 = tpu.matmul %26, %68, %cst_46 {dimension_numbers = #tpu.dot_dimension_numbers<[1], [0], [0], [1], [0, 0, 1, 1], [], []>} : vector<16x32xbf16>, vector<32x16xbf16>, vector<16x16xf32> -> vector<16x16xf32>
    %c0_47 = arith.constant 0 : index
    %c1_48 = arith.constant 1 : index
    %c0_49 = arith.constant 0 : index
    %c0_50 = arith.constant 0 : index
    %70 = vector.load %arg8[%c0_47, %c1_48, %c0_49, %c0_50] : memref<2x2x1x16xf32, #tpu.memory_space<vmem>>, vector<1x1x1x16xf32>
    %71 = vector.shape_cast %70 : vector<1x1x1x16xf32> to vector<1x16xf32>
    %72 = vector.broadcast %71 : vector<1x16xf32> to vector<16x16xf32>
    %73 = arith.addf %69, %72 : vector<16x16xf32>
    %c0_51 = arith.constant 0 : index
    %c1_52 = arith.constant 1 : index
    %c0_53 = arith.constant 0 : index
    %c0_54 = arith.constant 0 : index
    %74 = vector.load %arg6[%c0_51, %c1_52, %c0_53, %c0_54] : memref<2x2x32x16xbf16, #tpu.memory_space<vmem>>, vector<1x1x32x16xbf16>
    %75 = vector.shape_cast %74 : vector<1x1x32x16xbf16> to vector<32x16xbf16>
    %cst_55 = arith.constant dense<0.000000e+00> : vector<16x16xf32>
    %76 = tpu.matmul %26, %75, %cst_55 {dimension_numbers = #tpu.dot_dimension_numbers<[1], [0], [0], [1], [0, 0, 1, 1], [], []>} : vector<16x32xbf16>, vector<32x16xbf16>, vector<16x16xf32> -> vector<16x16xf32>
    %c0_56 = arith.constant 0 : index
    %c1_57 = arith.constant 1 : index
    %c0_58 = arith.constant 0 : index
    %c0_59 = arith.constant 0 : index
    %77 = vector.load %arg9[%c0_56, %c1_57, %c0_58, %c0_59] : memref<2x2x1x16xf32, #tpu.memory_space<vmem>>, vector<1x1x1x16xf32>
    %78 = vector.shape_cast %77 : vector<1x1x1x16xf32> to vector<1x16xf32>
    %79 = vector.broadcast %78 : vector<1x16xf32> to vector<16x16xf32>
    %80 = arith.addf %76, %79 : vector<16x16xf32>
    %c0_60 = arith.constant 0 : index
    %c1_61 = arith.constant 1 : index
    %c0_62 = arith.constant 0 : index
    %c0_63 = arith.constant 0 : index
    %81 = vector.load %arg7[%c0_60, %c1_61, %c0_62, %c0_63] : memref<2x2x32x16xbf16, #tpu.memory_space<vmem>>, vector<1x1x32x16xbf16>
    %82 = vector.shape_cast %81 : vector<1x1x32x16xbf16> to vector<32x16xbf16>
    %cst_64 = arith.constant dense<0.000000e+00> : vector<16x16xf32>
    %83 = tpu.matmul %26, %82, %cst_64 {dimension_numbers = #tpu.dot_dimension_numbers<[1], [0], [0], [1], [0, 0, 1, 1], [], []>} : vector<16x32xbf16>, vector<32x16xbf16>, vector<16x16xf32> -> vector<16x16xf32>
    %c0_65 = arith.constant 0 : index
    %c1_66 = arith.constant 1 : index
    %c0_67 = arith.constant 0 : index
    %c0_68 = arith.constant 0 : index
    %84 = vector.load %arg10[%c0_65, %c1_66, %c0_67, %c0_68] : memref<2x2x1x16xf32, #tpu.memory_space<vmem>>, vector<1x1x1x16xf32>
    %85 = vector.shape_cast %84 : vector<1x1x1x16xf32> to vector<1x16xf32>
    %86 = vector.broadcast %85 : vector<1x16xf32> to vector<16x16xf32>
    %87 = arith.addf %83, %86 : vector<16x16xf32>
    %88 = arith.truncf %73 : vector<16x16xf32> to vector<16x16xbf16>
    %89 = arith.truncf %80 : vector<16x16xf32> to vector<16x16xbf16>
    %cst_69 = arith.constant dense<0.000000e+00> : vector<16x16xf32>
    %90 = tpu.matmul %88, %89, %cst_69 {dimension_numbers = #tpu.dot_dimension_numbers<[1], [1], [0], [0], [0, 0, 1, 0], [], []>} : vector<16x16xbf16>, vector<16x16xbf16>, vector<16x16xf32> -> vector<16x16xf32>
    %cst_70 = arith.constant 2.500000e-01 : f32
    %91 = vector.broadcast %cst_70 : f32 to vector<16x16xf32>
    %92 = arith.mulf %90, %91 : vector<16x16xf32>
    %93 = arith.addf %92, %25 : vector<16x16xf32>
    %cst_71 = arith.constant dense<0xFF800000> : vector<16xf32>
    %94 = vector.multi_reduction <maximumf>, %93, %cst_71 [1] : vector<16x16xf32> to vector<16xf32>
    %95 = vector.shape_cast %94 : vector<16xf32> to vector<16x1xf32>
    %96 = vector.broadcast %95 : vector<16x1xf32> to vector<16x16xf32>
    %97 = arith.subf %93, %96 : vector<16x16xf32>
    %98 = math.exp %97 : vector<16x16xf32>
    %cst_72 = arith.constant dense<0.000000e+00> : vector<16xf32>
    %99 = vector.multi_reduction <add>, %98, %cst_72 [1] : vector<16x16xf32> to vector<16xf32>
    %100 = vector.shape_cast %99 : vector<16xf32> to vector<16x1xf32>
    %101 = tpu.reciprocal %100 {approx = true} : vector<16x1xf32> -> vector<16x1xf32>
    %102 = vector.broadcast %101 : vector<16x1xf32> to vector<16x16xf32>
    %103 = arith.mulf %98, %102 : vector<16x16xf32>
    %104 = arith.truncf %103 : vector<16x16xf32> to vector<16x16xbf16>
    %105 = arith.truncf %87 : vector<16x16xf32> to vector<16x16xbf16>
    %cst_73 = arith.constant dense<0.000000e+00> : vector<16x16xf32>
    %106 = tpu.matmul %104, %105, %cst_73 {dimension_numbers = #tpu.dot_dimension_numbers<[1], [0], [0], [1], [0, 0, 1, 1], [], []>} : vector<16x16xbf16>, vector<16x16xbf16>, vector<16x16xf32> -> vector<16x16xf32>
    %107 = tpu.concatenate %66, %106 in 1 : vector<16x16xf32>, vector<16x16xf32> -> vector<16x32xf32>
    %108 = arith.truncf %107 : vector<16x32xf32> to vector<16x32xbf16>
    %c0_74 = arith.constant 0 : index
    %c0_75 = arith.constant 0 : index
    %c0_76 = arith.constant 0 : index
    %109 = vector.load %arg11[%c0_74, %c0_75, %c0_76] : memref<2x32x32xbf16, #tpu.memory_space<vmem>>, vector<1x32x32xbf16>
    %110 = vector.shape_cast %109 : vector<1x32x32xbf16> to vector<32x32xbf16>
    %cst_77 = arith.constant dense<0.000000e+00> : vector<16x32xf32>
    %111 = tpu.matmul %108, %110, %cst_77 {dimension_numbers = #tpu.dot_dimension_numbers<[1], [0], [0], [1], [0, 0, 1, 1], [], []>} : vector<16x32xbf16>, vector<32x32xbf16>, vector<16x32xf32> -> vector<16x32xf32>
    %c0_78 = arith.constant 0 : index
    %c0_79 = arith.constant 0 : index
    %c0_80 = arith.constant 0 : index
    %112 = vector.load %arg12[%c0_78, %c0_79, %c0_80] : memref<2x1x32xf32, #tpu.memory_space<vmem>>, vector<1x1x32xf32>
    %113 = vector.shape_cast %112 : vector<1x1x32xf32> to vector<1x32xf32>
    %114 = vector.broadcast %113 : vector<1x32xf32> to vector<16x32xf32>
    %115 = arith.addf %111, %114 : vector<16x32xf32>
    %116 = arith.addf %24, %115 : vector<16x32xf32>
    %c0_81 = arith.constant 0 : index
    %c0_82 = arith.constant 0 : index
    %c0_83 = arith.constant 0 : index
    %117 = vector.load %arg13[%c0_81, %c0_82, %c0_83] : memref<2x1x32xf32, #tpu.memory_space<vmem>>, vector<1x1x32xf32>
    %118 = vector.shape_cast %117 : vector<1x1x32xf32> to vector<1x32xf32>
    %c0_84 = arith.constant 0 : index
    %c0_85 = arith.constant 0 : index
    %c0_86 = arith.constant 0 : index
    %119 = vector.load %arg14[%c0_84, %c0_85, %c0_86] : memref<2x1x32xf32, #tpu.memory_space<vmem>>, vector<1x1x32xf32>
    %120 = vector.shape_cast %119 : vector<1x1x32xf32> to vector<1x32xf32>
    %cst_87 = arith.constant dense<0.000000e+00> : vector<16xf32>
    %121 = vector.multi_reduction <add>, %116, %cst_87 [1] : vector<16x32xf32> to vector<16xf32>
    %122 = vector.shape_cast %121 : vector<16xf32> to vector<16x1xf32>
    %cst_88 = arith.constant 3.200000e+01 : f32
    %123 = vector.broadcast %cst_88 : f32 to vector<16x1xf32>
    %124 = arith.divf %122, %123 : vector<16x1xf32>
    %125 = vector.broadcast %124 : vector<16x1xf32> to vector<16x32xf32>
    %126 = arith.subf %116, %125 : vector<16x32xf32>
    %127 = arith.mulf %126, %126 : vector<16x32xf32>
    %cst_89 = arith.constant dense<0.000000e+00> : vector<16xf32>
    %128 = vector.multi_reduction <add>, %127, %cst_89 [1] : vector<16x32xf32> to vector<16xf32>
    %129 = vector.shape_cast %128 : vector<16xf32> to vector<16x1xf32>
    %cst_90 = arith.constant 3.200000e+01 : f32
    %130 = vector.broadcast %cst_90 : f32 to vector<16x1xf32>
    %131 = arith.divf %129, %130 : vector<16x1xf32>
    %132 = vector.broadcast %124 : vector<16x1xf32> to vector<16x32xf32>
    %133 = arith.subf %116, %132 : vector<16x32xf32>
    %cst_91 = arith.constant 9.99999996E-13 : f32
    %134 = vector.broadcast %cst_91 : f32 to vector<16x1xf32>
    %135 = arith.addf %131, %134 : vector<16x1xf32>
    %136 = math.rsqrt %135 : vector<16x1xf32>
    %137 = vector.broadcast %136 : vector<16x1xf32> to vector<16x32xf32>
    %138 = arith.mulf %133, %137 : vector<16x32xf32>
    %139 = vector.broadcast %118 : vector<1x32xf32> to vector<16x32xf32>
    %140 = arith.mulf %138, %139 : vector<16x32xf32>
    %141 = vector.broadcast %120 : vector<1x32xf32> to vector<16x32xf32>
    %142 = arith.addf %140, %141 : vector<16x32xf32>
    %143 = arith.truncf %142 : vector<16x32xf32> to vector<16x32xbf16>
    %c0_92 = arith.constant 0 : index
    %c0_93 = arith.constant 0 : index
    %c0_94 = arith.constant 0 : index
    %144 = vector.load %arg15[%c0_92, %c0_93, %c0_94] : memref<2x32x64xbf16, #tpu.memory_space<vmem>>, vector<1x32x64xbf16>
    %145 = vector.shape_cast %144 : vector<1x32x64xbf16> to vector<32x64xbf16>
    %cst_95 = arith.constant dense<0.000000e+00> : vector<16x64xf32>
    %146 = tpu.matmul %143, %145, %cst_95 {dimension_numbers = #tpu.dot_dimension_numbers<[1], [0], [0], [1], [0, 0, 1, 1], [], []>} : vector<16x32xbf16>, vector<32x64xbf16>, vector<16x64xf32> -> vector<16x64xf32>
    %c0_96 = arith.constant 0 : index
    %c0_97 = arith.constant 0 : index
    %c0_98 = arith.constant 0 : index
    %147 = vector.load %arg16[%c0_96, %c0_97, %c0_98] : memref<2x1x64xf32, #tpu.memory_space<vmem>>, vector<1x1x64xf32>
    %148 = vector.shape_cast %147 : vector<1x1x64xf32> to vector<1x64xf32>
    %149 = vector.broadcast %148 : vector<1x64xf32> to vector<16x64xf32>
    %150 = arith.addf %146, %149 : vector<16x64xf32>
    %151 = arith.mulf %150, %150 : vector<16x64xf32>
    %152 = arith.mulf %150, %151 : vector<16x64xf32>
    %cst_99 = arith.constant 4.471500e-02 : f32
    %153 = vector.broadcast %cst_99 : f32 to vector<16x64xf32>
    %154 = arith.mulf %153, %152 : vector<16x64xf32>
    %155 = arith.addf %150, %154 : vector<16x64xf32>
    %cst_100 = arith.constant 0.797884583 : f32
    %156 = vector.broadcast %cst_100 : f32 to vector<16x64xf32>
    %157 = arith.mulf %156, %155 : vector<16x64xf32>
    %158 = math.tanh %157 : vector<16x64xf32>
    %cst_101 = arith.constant 1.000000e+00 : f32
    %159 = vector.broadcast %cst_101 : f32 to vector<16x64xf32>
    %160 = arith.addf %159, %158 : vector<16x64xf32>
    %cst_102 = arith.constant 5.000000e-01 : f32
    %161 = vector.broadcast %cst_102 : f32 to vector<16x64xf32>
    %162 = arith.mulf %161, %160 : vector<16x64xf32>
    %163 = arith.mulf %150, %162 : vector<16x64xf32>
    %164 = arith.truncf %163 : vector<16x64xf32> to vector<16x64xbf16>
    %c0_103 = arith.constant 0 : index
    %c0_104 = arith.constant 0 : index
    %c0_105 = arith.constant 0 : index
    %165 = vector.load %arg17[%c0_103, %c0_104, %c0_105] : memref<2x64x32xbf16, #tpu.memory_space<vmem>>, vector<1x64x32xbf16>
    %166 = vector.shape_cast %165 : vector<1x64x32xbf16> to vector<64x32xbf16>
    %cst_106 = arith.constant dense<0.000000e+00> : vector<16x32xf32>
    %167 = tpu.matmul %164, %166, %cst_106 {dimension_numbers = #tpu.dot_dimension_numbers<[1], [0], [0], [1], [0, 0, 1, 1], [], []>} : vector<16x64xbf16>, vector<64x32xbf16>, vector<16x32xf32> -> vector<16x32xf32>
    %c0_107 = arith.constant 0 : index
    %c0_108 = arith.constant 0 : index
    %c0_109 = arith.constant 0 : index
    %168 = vector.load %arg18[%c0_107, %c0_108, %c0_109] : memref<2x1x32xf32, #tpu.memory_space<vmem>>, vector<1x1x32xf32>
    %169 = vector.shape_cast %168 : vector<1x1x32xf32> to vector<1x32xf32>
    %170 = vector.broadcast %169 : vector<1x32xf32> to vector<16x32xf32>
    %171 = arith.addf %167, %170 : vector<16x32xf32>
    %172 = arith.addf %142, %171 : vector<16x32xf32>
    %c0_110 = arith.constant 0 : index
    %c0_111 = arith.constant 0 : index
    %c0_112 = arith.constant 0 : index
    %173 = vector.load %arg19[%c0_110, %c0_111, %c0_112] : memref<2x1x32xf32, #tpu.memory_space<vmem>>, vector<1x1x32xf32>
    %174 = vector.shape_cast %173 : vector<1x1x32xf32> to vector<1x32xf32>
    %c0_113 = arith.constant 0 : index
    %c0_114 = arith.constant 0 : index
    %c0_115 = arith.constant 0 : index
    %175 = vector.load %arg20[%c0_113, %c0_114, %c0_115] : memref<2x1x32xf32, #tpu.memory_space<vmem>>, vector<1x1x32xf32>
    %176 = vector.shape_cast %175 : vector<1x1x32xf32> to vector<1x32xf32>
    %cst_116 = arith.constant dense<0.000000e+00> : vector<16xf32>
    %177 = vector.multi_reduction <add>, %172, %cst_116 [1] : vector<16x32xf32> to vector<16xf32>
    %178 = vector.shape_cast %177 : vector<16xf32> to vector<16x1xf32>
    %cst_117 = arith.constant 3.200000e+01 : f32
    %179 = vector.broadcast %cst_117 : f32 to vector<16x1xf32>
    %180 = arith.divf %178, %179 : vector<16x1xf32>
    %181 = vector.broadcast %180 : vector<16x1xf32> to vector<16x32xf32>
    %182 = arith.subf %172, %181 : vector<16x32xf32>
    %183 = arith.mulf %182, %182 : vector<16x32xf32>
    %cst_118 = arith.constant dense<0.000000e+00> : vector<16xf32>
    %184 = vector.multi_reduction <add>, %183, %cst_118 [1] : vector<16x32xf32> to vector<16xf32>
    %185 = vector.shape_cast %184 : vector<16xf32> to vector<16x1xf32>
    %cst_119 = arith.constant 3.200000e+01 : f32
    %186 = vector.broadcast %cst_119 : f32 to vector<16x1xf32>
    %187 = arith.divf %185, %186 : vector<16x1xf32>
    %188 = vector.broadcast %180 : vector<16x1xf32> to vector<16x32xf32>
    %189 = arith.subf %172, %188 : vector<16x32xf32>
    %cst_120 = arith.constant 9.99999996E-13 : f32
    %190 = vector.broadcast %cst_120 : f32 to vector<16x1xf32>
    %191 = arith.addf %187, %190 : vector<16x1xf32>
    %192 = math.rsqrt %191 : vector<16x1xf32>
    %193 = vector.broadcast %192 : vector<16x1xf32> to vector<16x32xf32>
    %194 = arith.mulf %189, %193 : vector<16x32xf32>
    %195 = vector.broadcast %174 : vector<1x32xf32> to vector<16x32xf32>
    %196 = arith.mulf %194, %195 : vector<16x32xf32>
    %197 = vector.broadcast %176 : vector<1x32xf32> to vector<16x32xf32>
    %198 = arith.addf %196, %197 : vector<16x32xf32>
    %199 = arith.truncf %198 : vector<16x32xf32> to vector<16x32xbf16>
    %c1_121 = arith.constant 1 : index
    %c0_122 = arith.constant 0 : index
    %c0_123 = arith.constant 0 : index
    %c0_124 = arith.constant 0 : index
    %200 = vector.load %arg5[%c1_121, %c0_122, %c0_123, %c0_124] : memref<2x2x32x16xbf16, #tpu.memory_space<vmem>>, vector<1x1x32x16xbf16>
    %201 = vector.shape_cast %200 : vector<1x1x32x16xbf16> to vector<32x16xbf16>
    %cst_125 = arith.constant dense<0.000000e+00> : vector<16x16xf32>
    %202 = tpu.matmul %199, %201, %cst_125 {dimension_numbers = #tpu.dot_dimension_numbers<[1], [0], [0], [1], [0, 0, 1, 1], [], []>} : vector<16x32xbf16>, vector<32x16xbf16>, vector<16x16xf32> -> vector<16x16xf32>
    %c1_126 = arith.constant 1 : index
    %c0_127 = arith.constant 0 : index
    %c0_128 = arith.constant 0 : index
    %c0_129 = arith.constant 0 : index
    %203 = vector.load %arg8[%c1_126, %c0_127, %c0_128, %c0_129] : memref<2x2x1x16xf32, #tpu.memory_space<vmem>>, vector<1x1x1x16xf32>
    %204 = vector.shape_cast %203 : vector<1x1x1x16xf32> to vector<1x16xf32>
    %205 = vector.broadcast %204 : vector<1x16xf32> to vector<16x16xf32>
    %206 = arith.addf %202, %205 : vector<16x16xf32>
    %c1_130 = arith.constant 1 : index
    %c0_131 = arith.constant 0 : index
    %c0_132 = arith.constant 0 : index
    %c0_133 = arith.constant 0 : index
    %207 = vector.load %arg6[%c1_130, %c0_131, %c0_132, %c0_133] : memref<2x2x32x16xbf16, #tpu.memory_space<vmem>>, vector<1x1x32x16xbf16>
    %208 = vector.shape_cast %207 : vector<1x1x32x16xbf16> to vector<32x16xbf16>
    %cst_134 = arith.constant dense<0.000000e+00> : vector<16x16xf32>
    %209 = tpu.matmul %199, %208, %cst_134 {dimension_numbers = #tpu.dot_dimension_numbers<[1], [0], [0], [1], [0, 0, 1, 1], [], []>} : vector<16x32xbf16>, vector<32x16xbf16>, vector<16x16xf32> -> vector<16x16xf32>
    %c1_135 = arith.constant 1 : index
    %c0_136 = arith.constant 0 : index
    %c0_137 = arith.constant 0 : index
    %c0_138 = arith.constant 0 : index
    %210 = vector.load %arg9[%c1_135, %c0_136, %c0_137, %c0_138] : memref<2x2x1x16xf32, #tpu.memory_space<vmem>>, vector<1x1x1x16xf32>
    %211 = vector.shape_cast %210 : vector<1x1x1x16xf32> to vector<1x16xf32>
    %212 = vector.broadcast %211 : vector<1x16xf32> to vector<16x16xf32>
    %213 = arith.addf %209, %212 : vector<16x16xf32>
    %c1_139 = arith.constant 1 : index
    %c0_140 = arith.constant 0 : index
    %c0_141 = arith.constant 0 : index
    %c0_142 = arith.constant 0 : index
    %214 = vector.load %arg7[%c1_139, %c0_140, %c0_141, %c0_142] : memref<2x2x32x16xbf16, #tpu.memory_space<vmem>>, vector<1x1x32x16xbf16>
    %215 = vector.shape_cast %214 : vector<1x1x32x16xbf16> to vector<32x16xbf16>
    %cst_143 = arith.constant dense<0.000000e+00> : vector<16x16xf32>
    %216 = tpu.matmul %199, %215, %cst_143 {dimension_numbers = #tpu.dot_dimension_numbers<[1], [0], [0], [1], [0, 0, 1, 1], [], []>} : vector<16x32xbf16>, vector<32x16xbf16>, vector<16x16xf32> -> vector<16x16xf32>
    %c1_144 = arith.constant 1 : index
    %c0_145 = arith.constant 0 : index
    %c0_146 = arith.constant 0 : index
    %c0_147 = arith.constant 0 : index
    %217 = vector.load %arg10[%c1_144, %c0_145, %c0_146, %c0_147] : memref<2x2x1x16xf32, #tpu.memory_space<vmem>>, vector<1x1x1x16xf32>
    %218 = vector.shape_cast %217 : vector<1x1x1x16xf32> to vector<1x16xf32>
    %219 = vector.broadcast %218 : vector<1x16xf32> to vector<16x16xf32>
    %220 = arith.addf %216, %219 : vector<16x16xf32>
    %221 = arith.truncf %206 : vector<16x16xf32> to vector<16x16xbf16>
    %222 = arith.truncf %213 : vector<16x16xf32> to vector<16x16xbf16>
    %cst_148 = arith.constant dense<0.000000e+00> : vector<16x16xf32>
    %223 = tpu.matmul %221, %222, %cst_148 {dimension_numbers = #tpu.dot_dimension_numbers<[1], [1], [0], [0], [0, 0, 1, 0], [], []>} : vector<16x16xbf16>, vector<16x16xbf16>, vector<16x16xf32> -> vector<16x16xf32>
    %cst_149 = arith.constant 2.500000e-01 : f32
    %224 = vector.broadcast %cst_149 : f32 to vector<16x16xf32>
    %225 = arith.mulf %223, %224 : vector<16x16xf32>
    %226 = arith.addf %225, %25 : vector<16x16xf32>
    %cst_150 = arith.constant dense<0xFF800000> : vector<16xf32>
    %227 = vector.multi_reduction <maximumf>, %226, %cst_150 [1] : vector<16x16xf32> to vector<16xf32>
    %228 = vector.shape_cast %227 : vector<16xf32> to vector<16x1xf32>
    %229 = vector.broadcast %228 : vector<16x1xf32> to vector<16x16xf32>
    %230 = arith.subf %226, %229 : vector<16x16xf32>
    %231 = math.exp %230 : vector<16x16xf32>
    %cst_151 = arith.constant dense<0.000000e+00> : vector<16xf32>
    %232 = vector.multi_reduction <add>, %231, %cst_151 [1] : vector<16x16xf32> to vector<16xf32>
    %233 = vector.shape_cast %232 : vector<16xf32> to vector<16x1xf32>
    %234 = tpu.reciprocal %233 {approx = true} : vector<16x1xf32> -> vector<16x1xf32>
    %235 = vector.broadcast %234 : vector<16x1xf32> to vector<16x16xf32>
    %236 = arith.mulf %231, %235 : vector<16x16xf32>
    %237 = arith.truncf %236 : vector<16x16xf32> to vector<16x16xbf16>
    %238 = arith.truncf %220 : vector<16x16xf32> to vector<16x16xbf16>
    %cst_152 = arith.constant dense<0.000000e+00> : vector<16x16xf32>
    %239 = tpu.matmul %237, %238, %cst_152 {dimension_numbers = #tpu.dot_dimension_numbers<[1], [0], [0], [1], [0, 0, 1, 1], [], []>} : vector<16x16xbf16>, vector<16x16xbf16>, vector<16x16xf32> -> vector<16x16xf32>
    %c1_153 = arith.constant 1 : index
    %c1_154 = arith.constant 1 : index
    %c0_155 = arith.constant 0 : index
    %c0_156 = arith.constant 0 : index
    %240 = vector.load %arg5[%c1_153, %c1_154, %c0_155, %c0_156] : memref<2x2x32x16xbf16, #tpu.memory_space<vmem>>, vector<1x1x32x16xbf16>
    %241 = vector.shape_cast %240 : vector<1x1x32x16xbf16> to vector<32x16xbf16>
    %cst_157 = arith.constant dense<0.000000e+00> : vector<16x16xf32>
    %242 = tpu.matmul %199, %241, %cst_157 {dimension_numbers = #tpu.dot_dimension_numbers<[1], [0], [0], [1], [0, 0, 1, 1], [], []>} : vector<16x32xbf16>, vector<32x16xbf16>, vector<16x16xf32> -> vector<16x16xf32>
    %c1_158 = arith.constant 1 : index
    %c1_159 = arith.constant 1 : index
    %c0_160 = arith.constant 0 : index
    %c0_161 = arith.constant 0 : index
    %243 = vector.load %arg8[%c1_158, %c1_159, %c0_160, %c0_161] : memref<2x2x1x16xf32, #tpu.memory_space<vmem>>, vector<1x1x1x16xf32>
    %244 = vector.shape_cast %243 : vector<1x1x1x16xf32> to vector<1x16xf32>
    %245 = vector.broadcast %244 : vector<1x16xf32> to vector<16x16xf32>
    %246 = arith.addf %242, %245 : vector<16x16xf32>
    %c1_162 = arith.constant 1 : index
    %c1_163 = arith.constant 1 : index
    %c0_164 = arith.constant 0 : index
    %c0_165 = arith.constant 0 : index
    %247 = vector.load %arg6[%c1_162, %c1_163, %c0_164, %c0_165] : memref<2x2x32x16xbf16, #tpu.memory_space<vmem>>, vector<1x1x32x16xbf16>
    %248 = vector.shape_cast %247 : vector<1x1x32x16xbf16> to vector<32x16xbf16>
    %cst_166 = arith.constant dense<0.000000e+00> : vector<16x16xf32>
    %249 = tpu.matmul %199, %248, %cst_166 {dimension_numbers = #tpu.dot_dimension_numbers<[1], [0], [0], [1], [0, 0, 1, 1], [], []>} : vector<16x32xbf16>, vector<32x16xbf16>, vector<16x16xf32> -> vector<16x16xf32>
    %c1_167 = arith.constant 1 : index
    %c1_168 = arith.constant 1 : index
    %c0_169 = arith.constant 0 : index
    %c0_170 = arith.constant 0 : index
    %250 = vector.load %arg9[%c1_167, %c1_168, %c0_169, %c0_170] : memref<2x2x1x16xf32, #tpu.memory_space<vmem>>, vector<1x1x1x16xf32>
    %251 = vector.shape_cast %250 : vector<1x1x1x16xf32> to vector<1x16xf32>
    %252 = vector.broadcast %251 : vector<1x16xf32> to vector<16x16xf32>
    %253 = arith.addf %249, %252 : vector<16x16xf32>
    %c1_171 = arith.constant 1 : index
    %c1_172 = arith.constant 1 : index
    %c0_173 = arith.constant 0 : index
    %c0_174 = arith.constant 0 : index
    %254 = vector.load %arg7[%c1_171, %c1_172, %c0_173, %c0_174] : memref<2x2x32x16xbf16, #tpu.memory_space<vmem>>, vector<1x1x32x16xbf16>
    %255 = vector.shape_cast %254 : vector<1x1x32x16xbf16> to vector<32x16xbf16>
    %cst_175 = arith.constant dense<0.000000e+00> : vector<16x16xf32>
    %256 = tpu.matmul %199, %255, %cst_175 {dimension_numbers = #tpu.dot_dimension_numbers<[1], [0], [0], [1], [0, 0, 1, 1], [], []>} : vector<16x32xbf16>, vector<32x16xbf16>, vector<16x16xf32> -> vector<16x16xf32>
    %c1_176 = arith.constant 1 : index
    %c1_177 = arith.constant 1 : index
    %c0_178 = arith.constant 0 : index
    %c0_179 = arith.constant 0 : index
    %257 = vector.load %arg10[%c1_176, %c1_177, %c0_178, %c0_179] : memref<2x2x1x16xf32, #tpu.memory_space<vmem>>, vector<1x1x1x16xf32>
    %258 = vector.shape_cast %257 : vector<1x1x1x16xf32> to vector<1x16xf32>
    %259 = vector.broadcast %258 : vector<1x16xf32> to vector<16x16xf32>
    %260 = arith.addf %256, %259 : vector<16x16xf32>
    %261 = arith.truncf %246 : vector<16x16xf32> to vector<16x16xbf16>
    %262 = arith.truncf %253 : vector<16x16xf32> to vector<16x16xbf16>
    %cst_180 = arith.constant dense<0.000000e+00> : vector<16x16xf32>
    %263 = tpu.matmul %261, %262, %cst_180 {dimension_numbers = #tpu.dot_dimension_numbers<[1], [1], [0], [0], [0, 0, 1, 0], [], []>} : vector<16x16xbf16>, vector<16x16xbf16>, vector<16x16xf32> -> vector<16x16xf32>
    %cst_181 = arith.constant 2.500000e-01 : f32
    %264 = vector.broadcast %cst_181 : f32 to vector<16x16xf32>
    %265 = arith.mulf %263, %264 : vector<16x16xf32>
    %266 = arith.addf %265, %25 : vector<16x16xf32>
    %cst_182 = arith.constant dense<0xFF800000> : vector<16xf32>
    %267 = vector.multi_reduction <maximumf>, %266, %cst_182 [1] : vector<16x16xf32> to vector<16xf32>
    %268 = vector.shape_cast %267 : vector<16xf32> to vector<16x1xf32>
    %269 = vector.broadcast %268 : vector<16x1xf32> to vector<16x16xf32>
    %270 = arith.subf %266, %269 : vector<16x16xf32>
    %271 = math.exp %270 : vector<16x16xf32>
    %cst_183 = arith.constant dense<0.000000e+00> : vector<16xf32>
    %272 = vector.multi_reduction <add>, %271, %cst_183 [1] : vector<16x16xf32> to vector<16xf32>
    %273 = vector.shape_cast %272 : vector<16xf32> to vector<16x1xf32>
    %274 = tpu.reciprocal %273 {approx = true} : vector<16x1xf32> -> vector<16x1xf32>
    %275 = vector.broadcast %274 : vector<16x1xf32> to vector<16x16xf32>
    %276 = arith.mulf %271, %275 : vector<16x16xf32>
    %277 = arith.truncf %276 : vector<16x16xf32> to vector<16x16xbf16>
    %278 = arith.truncf %260 : vector<16x16xf32> to vector<16x16xbf16>
    %cst_184 = arith.constant dense<0.000000e+00> : vector<16x16xf32>
    %279 = tpu.matmul %277, %278, %cst_184 {dimension_numbers = #tpu.dot_dimension_numbers<[1], [0], [0], [1], [0, 0, 1, 1], [], []>} : vector<16x16xbf16>, vector<16x16xbf16>, vector<16x16xf32> -> vector<16x16xf32>
    %280 = tpu.concatenate %239, %279 in 1 : vector<16x16xf32>, vector<16x16xf32> -> vector<16x32xf32>
    %281 = arith.truncf %280 : vector<16x32xf32> to vector<16x32xbf16>
    %c1_185 = arith.constant 1 : index
    %c0_186 = arith.constant 0 : index
    %c0_187 = arith.constant 0 : index
    %282 = vector.load %arg11[%c1_185, %c0_186, %c0_187] : memref<2x32x32xbf16, #tpu.memory_space<vmem>>, vector<1x32x32xbf16>
    %283 = vector.shape_cast %282 : vector<1x32x32xbf16> to vector<32x32xbf16>
    %cst_188 = arith.constant dense<0.000000e+00> : vector<16x32xf32>
    %284 = tpu.matmul %281, %283, %cst_188 {dimension_numbers = #tpu.dot_dimension_numbers<[1], [0], [0], [1], [0, 0, 1, 1], [], []>} : vector<16x32xbf16>, vector<32x32xbf16>, vector<16x32xf32> -> vector<16x32xf32>
    %c1_189 = arith.constant 1 : index
    %c0_190 = arith.constant 0 : index
    %c0_191 = arith.constant 0 : index
    %285 = vector.load %arg12[%c1_189, %c0_190, %c0_191] : memref<2x1x32xf32, #tpu.memory_space<vmem>>, vector<1x1x32xf32>
    %286 = vector.shape_cast %285 : vector<1x1x32xf32> to vector<1x32xf32>
    %287 = vector.broadcast %286 : vector<1x32xf32> to vector<16x32xf32>
    %288 = arith.addf %284, %287 : vector<16x32xf32>
    %289 = arith.addf %198, %288 : vector<16x32xf32>
    %c1_192 = arith.constant 1 : index
    %c0_193 = arith.constant 0 : index
    %c0_194 = arith.constant 0 : index
    %290 = vector.load %arg13[%c1_192, %c0_193, %c0_194] : memref<2x1x32xf32, #tpu.memory_space<vmem>>, vector<1x1x32xf32>
    %291 = vector.shape_cast %290 : vector<1x1x32xf32> to vector<1x32xf32>
    %c1_195 = arith.constant 1 : index
    %c0_196 = arith.constant 0 : index
    %c0_197 = arith.constant 0 : index
    %292 = vector.load %arg14[%c1_195, %c0_196, %c0_197] : memref<2x1x32xf32, #tpu.memory_space<vmem>>, vector<1x1x32xf32>
    %293 = vector.shape_cast %292 : vector<1x1x32xf32> to vector<1x32xf32>
    %cst_198 = arith.constant dense<0.000000e+00> : vector<16xf32>
    %294 = vector.multi_reduction <add>, %289, %cst_198 [1] : vector<16x32xf32> to vector<16xf32>
    %295 = vector.shape_cast %294 : vector<16xf32> to vector<16x1xf32>
    %cst_199 = arith.constant 3.200000e+01 : f32
    %296 = vector.broadcast %cst_199 : f32 to vector<16x1xf32>
    %297 = arith.divf %295, %296 : vector<16x1xf32>
    %298 = vector.broadcast %297 : vector<16x1xf32> to vector<16x32xf32>
    %299 = arith.subf %289, %298 : vector<16x32xf32>
    %300 = arith.mulf %299, %299 : vector<16x32xf32>
    %cst_200 = arith.constant dense<0.000000e+00> : vector<16xf32>
    %301 = vector.multi_reduction <add>, %300, %cst_200 [1] : vector<16x32xf32> to vector<16xf32>
    %302 = vector.shape_cast %301 : vector<16xf32> to vector<16x1xf32>
    %cst_201 = arith.constant 3.200000e+01 : f32
    %303 = vector.broadcast %cst_201 : f32 to vector<16x1xf32>
    %304 = arith.divf %302, %303 : vector<16x1xf32>
    %305 = vector.broadcast %297 : vector<16x1xf32> to vector<16x32xf32>
    %306 = arith.subf %289, %305 : vector<16x32xf32>
    %cst_202 = arith.constant 9.99999996E-13 : f32
    %307 = vector.broadcast %cst_202 : f32 to vector<16x1xf32>
    %308 = arith.addf %304, %307 : vector<16x1xf32>
    %309 = math.rsqrt %308 : vector<16x1xf32>
    %310 = vector.broadcast %309 : vector<16x1xf32> to vector<16x32xf32>
    %311 = arith.mulf %306, %310 : vector<16x32xf32>
    %312 = vector.broadcast %291 : vector<1x32xf32> to vector<16x32xf32>
    %313 = arith.mulf %311, %312 : vector<16x32xf32>
    %314 = vector.broadcast %293 : vector<1x32xf32> to vector<16x32xf32>
    %315 = arith.addf %313, %314 : vector<16x32xf32>
    %316 = arith.truncf %315 : vector<16x32xf32> to vector<16x32xbf16>
    %c1_203 = arith.constant 1 : index
    %c0_204 = arith.constant 0 : index
    %c0_205 = arith.constant 0 : index
    %317 = vector.load %arg15[%c1_203, %c0_204, %c0_205] : memref<2x32x64xbf16, #tpu.memory_space<vmem>>, vector<1x32x64xbf16>
    %318 = vector.shape_cast %317 : vector<1x32x64xbf16> to vector<32x64xbf16>
    %cst_206 = arith.constant dense<0.000000e+00> : vector<16x64xf32>
    %319 = tpu.matmul %316, %318, %cst_206 {dimension_numbers = #tpu.dot_dimension_numbers<[1], [0], [0], [1], [0, 0, 1, 1], [], []>} : vector<16x32xbf16>, vector<32x64xbf16>, vector<16x64xf32> -> vector<16x64xf32>
    %c1_207 = arith.constant 1 : index
    %c0_208 = arith.constant 0 : index
    %c0_209 = arith.constant 0 : index
    %320 = vector.load %arg16[%c1_207, %c0_208, %c0_209] : memref<2x1x64xf32, #tpu.memory_space<vmem>>, vector<1x1x64xf32>
    %321 = vector.shape_cast %320 : vector<1x1x64xf32> to vector<1x64xf32>
    %322 = vector.broadcast %321 : vector<1x64xf32> to vector<16x64xf32>
    %323 = arith.addf %319, %322 : vector<16x64xf32>
    %324 = arith.mulf %323, %323 : vector<16x64xf32>
    %325 = arith.mulf %323, %324 : vector<16x64xf32>
    %cst_210 = arith.constant 4.471500e-02 : f32
    %326 = vector.broadcast %cst_210 : f32 to vector<16x64xf32>
    %327 = arith.mulf %326, %325 : vector<16x64xf32>
    %328 = arith.addf %323, %327 : vector<16x64xf32>
    %cst_211 = arith.constant 0.797884583 : f32
    %329 = vector.broadcast %cst_211 : f32 to vector<16x64xf32>
    %330 = arith.mulf %329, %328 : vector<16x64xf32>
    %331 = math.tanh %330 : vector<16x64xf32>
    %cst_212 = arith.constant 1.000000e+00 : f32
    %332 = vector.broadcast %cst_212 : f32 to vector<16x64xf32>
    %333 = arith.addf %332, %331 : vector<16x64xf32>
    %cst_213 = arith.constant 5.000000e-01 : f32
    %334 = vector.broadcast %cst_213 : f32 to vector<16x64xf32>
    %335 = arith.mulf %334, %333 : vector<16x64xf32>
    %336 = arith.mulf %323, %335 : vector<16x64xf32>
    %337 = arith.truncf %336 : vector<16x64xf32> to vector<16x64xbf16>
    %c1_214 = arith.constant 1 : index
    %c0_215 = arith.constant 0 : index
    %c0_216 = arith.constant 0 : index
    %338 = vector.load %arg17[%c1_214, %c0_215, %c0_216] : memref<2x64x32xbf16, #tpu.memory_space<vmem>>, vector<1x64x32xbf16>
    %339 = vector.shape_cast %338 : vector<1x64x32xbf16> to vector<64x32xbf16>
    %cst_217 = arith.constant dense<0.000000e+00> : vector<16x32xf32>
    %340 = tpu.matmul %337, %339, %cst_217 {dimension_numbers = #tpu.dot_dimension_numbers<[1], [0], [0], [1], [0, 0, 1, 1], [], []>} : vector<16x64xbf16>, vector<64x32xbf16>, vector<16x32xf32> -> vector<16x32xf32>
    %c1_218 = arith.constant 1 : index
    %c0_219 = arith.constant 0 : index
    %c0_220 = arith.constant 0 : index
    %341 = vector.load %arg18[%c1_218, %c0_219, %c0_220] : memref<2x1x32xf32, #tpu.memory_space<vmem>>, vector<1x1x32xf32>
    %342 = vector.shape_cast %341 : vector<1x1x32xf32> to vector<1x32xf32>
    %343 = vector.broadcast %342 : vector<1x32xf32> to vector<16x32xf32>
    %344 = arith.addf %340, %343 : vector<16x32xf32>
    %345 = arith.addf %315, %344 : vector<16x32xf32>
    %c1_221 = arith.constant 1 : index
    %c0_222 = arith.constant 0 : index
    %c0_223 = arith.constant 0 : index
    %346 = vector.load %arg19[%c1_221, %c0_222, %c0_223] : memref<2x1x32xf32, #tpu.memory_space<vmem>>, vector<1x1x32xf32>
    %347 = vector.shape_cast %346 : vector<1x1x32xf32> to vector<1x32xf32>
    %c1_224 = arith.constant 1 : index
    %c0_225 = arith.constant 0 : index
    %c0_226 = arith.constant 0 : index
    %348 = vector.load %arg20[%c1_224, %c0_225, %c0_226] : memref<2x1x32xf32, #tpu.memory_space<vmem>>, vector<1x1x32xf32>
    %349 = vector.shape_cast %348 : vector<1x1x32xf32> to vector<1x32xf32>
    %cst_227 = arith.constant dense<0.000000e+00> : vector<16xf32>
    %350 = vector.multi_reduction <add>, %345, %cst_227 [1] : vector<16x32xf32> to vector<16xf32>
    %351 = vector.shape_cast %350 : vector<16xf32> to vector<16x1xf32>
    %cst_228 = arith.constant 3.200000e+01 : f32
    %352 = vector.broadcast %cst_228 : f32 to vector<16x1xf32>
    %353 = arith.divf %351, %352 : vector<16x1xf32>
    %354 = vector.broadcast %353 : vector<16x1xf32> to vector<16x32xf32>
    %355 = arith.subf %345, %354 : vector<16x32xf32>
    %356 = arith.mulf %355, %355 : vector<16x32xf32>
    %cst_229 = arith.constant dense<0.000000e+00> : vector<16xf32>
    %357 = vector.multi_reduction <add>, %356, %cst_229 [1] : vector<16x32xf32> to vector<16xf32>
    %358 = vector.shape_cast %357 : vector<16xf32> to vector<16x1xf32>
    %cst_230 = arith.constant 3.200000e+01 : f32
    %359 = vector.broadcast %cst_230 : f32 to vector<16x1xf32>
    %360 = arith.divf %358, %359 : vector<16x1xf32>
    %361 = vector.broadcast %353 : vector<16x1xf32> to vector<16x32xf32>
    %362 = arith.subf %345, %361 : vector<16x32xf32>
    %cst_231 = arith.constant 9.99999996E-13 : f32
    %363 = vector.broadcast %cst_231 : f32 to vector<16x1xf32>
    %364 = arith.addf %360, %363 : vector<16x1xf32>
    %365 = math.rsqrt %364 : vector<16x1xf32>
    %366 = vector.broadcast %365 : vector<16x1xf32> to vector<16x32xf32>
    %367 = arith.mulf %362, %366 : vector<16x32xf32>
    %368 = vector.broadcast %347 : vector<1x32xf32> to vector<16x32xf32>
    %369 = arith.mulf %367, %368 : vector<16x32xf32>
    %370 = vector.broadcast %349 : vector<1x32xf32> to vector<16x32xf32>
    %371 = arith.addf %369, %370 : vector<16x32xf32>
    %372 = vector.extract_strided_slice %371 {offsets = [0, 0], sizes = [1, 32], strides = [1, 1]} : vector<16x32xf32> to vector<1x32xf32>
    %373 = vector.extract_strided_slice %371 {offsets = [8, 0], sizes = [1, 32], strides = [1, 1]} : vector<16x32xf32> to vector<1x32xf32>
    %374 = tpu.concatenate %372, %373 in 0 : vector<1x32xf32>, vector<1x32xf32> -> vector<2x32xf32>
    %375 = arith.truncf %374 : vector<2x32xf32> to vector<2x32xbf16>
    %c0_232 = arith.constant 0 : index
    %c0_233 = arith.constant 0 : index
    %376 = vector.load %arg21[%c0_232, %c0_233] : memref<32x32xbf16, #tpu.memory_space<vmem>>, vector<32x32xbf16>
    %cst_234 = arith.constant dense<0.000000e+00> : vector<2x32xf32>
    %377 = tpu.matmul %375, %376, %cst_234 {dimension_numbers = #tpu.dot_dimension_numbers<[1], [0], [0], [1], [0, 0, 1, 1], [], []>} : vector<2x32xbf16>, vector<32x32xbf16>, vector<2x32xf32> -> vector<2x32xf32>
    %c0_235 = arith.constant 0 : index
    %c0_236 = arith.constant 0 : index
    %378 = vector.load %arg22[%c0_235, %c0_236] : memref<1x32xf32, #tpu.memory_space<vmem>>, vector<1x32xf32>
    %379 = vector.broadcast %378 : vector<1x32xf32> to vector<2x32xf32>
    %380 = arith.addf %377, %379 : vector<2x32xf32>
    %381 = math.tanh %380 : vector<2x32xf32>
    %382 = arith.truncf %381 : vector<2x32xf32> to vector<2x32xbf16>
    %c0_237 = arith.constant 0 : index
    %c0_238 = arith.constant 0 : index
    %383 = vector.load %arg23[%c0_237, %c0_238] : memref<32x8xbf16, #tpu.memory_space<vmem>>, vector<32x8xbf16>
    %cst_239 = arith.constant dense<0.000000e+00> : vector<2x8xf32>
    %384 = tpu.matmul %382, %383, %cst_239 {dimension_numbers = #tpu.dot_dimension_numbers<[1], [0], [0], [1], [0, 0, 1, 1], [], []>} : vector<2x32xbf16>, vector<32x8xbf16>, vector<2x8xf32> -> vector<2x8xf32>
    %c0_240 = arith.constant 0 : index
    %c0_241 = arith.constant 0 : index
    %385 = vector.load %arg24[%c0_240, %c0_241] : memref<1x8xf32, #tpu.memory_space<vmem>>, vector<1x8xf32>
    %386 = vector.broadcast %385 : vector<1x8xf32> to vector<2x8xf32>
    %387 = arith.addf %384, %386 : vector<2x8xf32>
    %c0_242 = arith.constant 0 : index
    %c0_243 = arith.constant 0 : index
    %388 = vector.load %arg25[%c0_242, %c0_243] : memref<2x8xf32, #tpu.memory_space<vmem>>, vector<2x8xf32>
    tpu.vector_store %arg25[%c0_242, %c0_243], %387 {strides = array<i32>} : memref<2x8xf32, #tpu.memory_space<vmem>>, vector<2x8xf32>,
    %cst_244 = arith.constant dense<0xFF800000> : vector<2xf32>
    %389 = vector.multi_reduction <maximumf>, %387, %cst_244 [1] : vector<2x8xf32> to vector<2xf32>
    %390 = vector.shape_cast %389 : vector<2xf32> to vector<2x1xf32>
    %391 = vector.broadcast %390 : vector<2x1xf32> to vector<2x8xf32>
    %392 = arith.subf %387, %391 : vector<2x8xf32>
    %393 = math.exp %392 : vector<2x8xf32>
    %cst_245 = arith.constant dense<0.000000e+00> : vector<2xf32>
    %394 = vector.multi_reduction <add>, %393, %cst_245 [1] : vector<2x8xf32> to vector<2xf32>
    %395 = vector.shape_cast %394 : vector<2xf32> to vector<2x1xf32>
    %396 = tpu.reciprocal %395 {approx = true} : vector<2x1xf32> -> vector<2x1xf32>
    %397 = vector.broadcast %396 : vector<2x1xf32> to vector<2x8xf32>
    %398 = arith.mulf %393, %397 : vector<2x8xf32>
    %c0_246 = arith.constant 0 : index
    %c0_247 = arith.constant 0 : index
    %399 = vector.load %arg26[%c0_246, %c0_247] : memref<2x8xf32, #tpu.memory_space<vmem>>, vector<2x8xf32>
    tpu.vector_store %arg26[%c0_246, %c0_247], %398 {strides = array<i32>} : memref<2x8xf32, #tpu.memory_space<vmem>>, vector<2x8xf32>,
    return
  }
  func.func @transform_0(%arg0: i32) -> (i32, i32) {
    %c0_i32 = arith.constant 0 : i32
    %c0_i32_0 = arith.constant 0 : i32
    %c0_i32_1 = arith.constant 0 : i32
    return %c0_i32, %c0_i32_0 : i32, i32
  }
  func.func @transform_1(%arg0: i32) -> (i32, i32) {
    %c0_i32 = arith.constant 0 : i32
    %c0_i32_0 = arith.constant 0 : i32
    %c0_i32_1 = arith.constant 0 : i32
    return %c0_i32, %c0_i32_0 : i32, i32
  }
  func.func @transform_2(%arg0: i32) -> (i32, i32) {
    %c0_i32 = arith.constant 0 : i32
    %c0_i32_0 = arith.constant 0 : i32
    %c0_i32_1 = arith.constant 0 : i32
    return %c0_i32, %c0_i32_0 : i32, i32
  }
  func.func @transform_3(%arg0: i32) -> (i32, i32) {
    %c0_i32 = arith.constant 0 : i32
    %c0_i32_0 = arith.constant 0 : i32
    %c0_i32_1 = arith.constant 0 : i32
    return %c0_i32, %c0_i32_0 : i32, i32
  }
  func.func @transform_4(%arg0: i32) -> (i32, i32, i32, i32) {
    %c0_i32 = arith.constant 0 : i32
    %c0_i32_0 = arith.constant 0 : i32
    %c0_i32_1 = arith.constant 0 : i32
    %c0_i32_2 = arith.constant 0 : i32
    %c0_i32_3 = arith.constant 0 : i32
    return %c0_i32, %c0_i32_0, %c0_i32_1, %c0_i32_2 : i32, i32, i32, i32
  }
  func.func @transform_5(%arg0: i32) -> (i32, i32, i32, i32) {
    %c0_i32 = arith.constant 0 : i32
    %c0_i32_0 = arith.constant 0 : i32
    %c0_i32_1 = arith.constant 0 : i32
    %c0_i32_2 = arith.constant 0 : i32
    %c0_i32_3 = arith.constant 0 : i32
    return %c0_i32, %c0_i32_0, %c0_i32_1, %c0_i32_2 : i32, i32, i32, i32
  }
  func.func @transform_6(%arg0: i32) -> (i32, i32, i32, i32) {
    %c0_i32 = arith.constant 0 : i32
    %c0_i32_0 = arith.constant 0 : i32
    %c0_i32_1 = arith.constant 0 : i32
    %c0_i32_2 = arith.constant 0 : i32
    %c0_i32_3 = arith.constant 0 : i32
    return %c0_i32, %c0_i32_0, %c0_i32_1, %c0_i32_2 : i32, i32, i32, i32
  }
  func.func @transform_7(%arg0: i32) -> (i32, i32, i32, i32) {
    %c0_i32 = arith.constant 0 : i32
    %c0_i32_0 = arith.constant 0 : i32
    %c0_i32_1 = arith.constant 0 : i32
    %c0_i32_2 = arith.constant 0 : i32
    %c0_i32_3 = arith.constant 0 : i32
    return %c0_i32, %c0_i32_0, %c0_i32_1, %c0_i32_2 : i32, i32, i32, i32
  }
  func.func @transform_8(%arg0: i32) -> (i32, i32, i32, i32) {
    %c0_i32 = arith.constant 0 : i32
    %c0_i32_0 = arith.constant 0 : i32
    %c0_i32_1 = arith.constant 0 : i32
    %c0_i32_2 = arith.constant 0 : i32
    %c0_i32_3 = arith.constant 0 : i32
    return %c0_i32, %c0_i32_0, %c0_i32_1, %c0_i32_2 : i32, i32, i32, i32
  }
  func.func @transform_9(%arg0: i32) -> (i32, i32, i32, i32) {
    %c0_i32 = arith.constant 0 : i32
    %c0_i32_0 = arith.constant 0 : i32
    %c0_i32_1 = arith.constant 0 : i32
    %c0_i32_2 = arith.constant 0 : i32
    %c0_i32_3 = arith.constant 0 : i32
    return %c0_i32, %c0_i32_0, %c0_i32_1, %c0_i32_2 : i32, i32, i32, i32
  }
  func.func @transform_10(%arg0: i32) -> (i32, i32, i32) {
    %c0_i32 = arith.constant 0 : i32
    %c0_i32_0 = arith.constant 0 : i32
    %c0_i32_1 = arith.constant 0 : i32
    %c0_i32_2 = arith.constant 0 : i32
    return %c0_i32, %c0_i32_0, %c0_i32_1 : i32, i32, i32
  }
  func.func @transform_11(%arg0: i32) -> (i32, i32, i32) {
    %c0_i32 = arith.constant 0 : i32
    %c0_i32_0 = arith.constant 0 : i32
    %c0_i32_1 = arith.constant 0 : i32
    %c0_i32_2 = arith.constant 0 : i32
    return %c0_i32, %c0_i32_0, %c0_i32_1 : i32, i32, i32
  }
  func.func @transform_12(%arg0: i32) -> (i32, i32, i32) {
    %c0_i32 = arith.constant 0 : i32
    %c0_i32_0 = arith.constant 0 : i32
    %c0_i32_1 = arith.constant 0 : i32
    %c0_i32_2 = arith.constant 0 : i32
    return %c0_i32, %c0_i32_0, %c0_i32_1 : i32, i32, i32
  }
  func.func @transform_13(%arg0: i32) -> (i32, i32, i32) {
    %c0_i32 = arith.constant 0 : i32
    %c0_i32_0 = arith.constant 0 : i32
    %c0_i32_1 = arith.constant 0 : i32
    %c0_i32_2 = arith.constant 0 : i32
    return %c0_i32, %c0_i32_0, %c0_i32_1 : i32, i32, i32
  }
  func.func @transform_14(%arg0: i32) -> (i32, i32, i32) {
    %c0_i32 = arith.constant 0 : i32
    %c0_i32_0 = arith.constant 0 : i32
    %c0_i32_1 = arith.constant 0 : i32
    %c0_i32_2 = arith.constant 0 : i32
    return %c0_i32, %c0_i32_0, %c0_i32_1 : i32, i32, i32
  }
  func.func @transform_15(%arg0: i32) -> (i32, i32, i32) {
    %c0_i32 = arith.constant 0 : i32
    %c0_i32_0 = arith.constant 0 : i32
    %c0_i32_1 = arith.constant 0 : i32
    %c0_i32_2 = arith.constant 0 : i32
    return %c0_i32, %c0_i32_0, %c0_i32_1 : i32, i32, i32
  }
  func.func @transform_16(%arg0: i32) -> (i32, i32, i32) {
    %c0_i32 = arith.constant 0 : i32
    %c0_i32_0 = arith.constant 0 : i32
    %c0_i32_1 = arith.constant 0 : i32
    %c0_i32_2 = arith.constant 0 : i32
    return %c0_i32, %c0_i32_0, %c0_i32_1 : i32, i32, i32
  }
  func.func @transform_17(%arg0: i32) -> (i32, i32, i32) {
    %c0_i32 = arith.constant 0 : i32
    %c0_i32_0 = arith.constant 0 : i32
    %c0_i32_1 = arith.constant 0 : i32
    %c0_i32_2 = arith.constant 0 : i32
    return %c0_i32, %c0_i32_0, %c0_i32_1 : i32, i32, i32
  }
  func.func @transform_18(%arg0: i32) -> (i32, i32, i32) {
    %c0_i32 = arith.constant 0 : i32
    %c0_i32_0 = arith.constant 0 : i32
    %c0_i32_1 = arith.constant 0 : i32
    %c0_i32_2 = arith.constant 0 : i32
    return %c0_i32, %c0_i32_0, %c0_i32_1 : i32, i32, i32
  }
  func.func @transform_19(%arg0: i32) -> (i32, i32, i32) {
    %c0_i32 = arith.constant 0 : i32
    %c0_i32_0 = arith.constant 0 : i32
    %c0_i32_1 = arith.constant 0 : i32
    %c0_i32_2 = arith.constant 0 : i32
    return %c0_i32, %c0_i32_0, %c0_i32_1 : i32, i32, i32
  }
  func.func @transform_20(%arg0: i32) -> (i32, i32) {
    %c0_i32 = arith.constant 0 : i32
    %c0_i32_0 = arith.constant 0 : i32
    %c0_i32_1 = arith.constant 0 : i32
    return %c0_i32, %c0_i32_0 : i32, i32
  }
  func.func @transform_21(%arg0: i32) -> (i32, i32) {
    %c0_i32 = arith.constant 0 : i32
    %c0_i32_0 = arith.constant 0 : i32
    %c0_i32_1 = arith.constant 0 : i32
    return %c0_i32, %c0_i32_0 : i32, i32
  }
  func.func @transform_22(%arg0: i32) -> (i32, i32) {
    %c0_i32 = arith.constant 0 : i32
    %c0_i32_0 = arith.constant 0 : i32
    %c0_i32_1 = arith.constant 0 : i32
    return %c0_i32, %c0_i32_0 : i32, i32
  }
  func.func @transform_23(%arg0: i32) -> (i32, i32) {
    %c0_i32 = arith.constant 0 : i32
    %c0_i32_0 = arith.constant 0 : i32
    %c0_i32_1 = arith.constant 0 : i32
    return %c0_i32, %c0_i32_0 : i32, i32
  }
  func.func @transform_24(%arg0: i32) -> (i32, i32) {
    %c0_i32 = arith.constant 0 : i32
    %c0_i32_0 = arith.constant 0 : i32
    %c0_i32_1 = arith.constant 0 : i32
    return %c0_i32, %c0_i32_0 : i32, i32
  }
  func.func @transform_25(%arg0: i32) -> (i32, i32) {
    %c0_i32 = arith.constant 0 : i32
    %c0_i32_0 = arith.constant 0 : i32
    %c0_i32_1 = arith.constant 0 : i32
    return %c0_i32, %c0_i32_0 : i32, i32
  }
}

</mosaic_0001>

<llo_original>
// kernel: tpu_custom_call.1
$region0: #{tpu_custom_call.1}
  #allocation0 [shape = 'u32[]', space=smem, size = 0x4, offset = 0x4, fixed_abs, tag = 'smem constant byte address 0x4 - core index']
  #allocation1 [shape = 'u32[72,128]{1,0:T(1,128)}', space=vmem, size = 0x9000, scoped, tag = 'internal scratch']
  %s0 = inlined_call_operand.vmem [shape: f32[16,32], index: 0, kind: input, shape index: {}]
  %s1 = inlined_call_operand.vmem [shape: f32[16,16], index: 1, kind: input, shape index: {}]
  %s2 = inlined_call_operand.vmem [shape: f32[1,32], index: 2, kind: input, shape index: {}]
  %s3 = inlined_call_operand.vmem [shape: f32[1,32], index: 3, kind: input, shape index: {}]
  %s4 = inlined_call_operand.vmem [shape: bf16[2,2,32,16], index: 4, kind: input, shape index: {}]
  %s5 = inlined_call_operand.vmem [shape: bf16[2,2,32,16], index: 5, kind: input, shape index: {}]
  %s6 = inlined_call_operand.vmem [shape: bf16[2,2,32,16], index: 6, kind: input, shape index: {}]
  %s7 = inlined_call_operand.vmem [shape: f32[2,2,1,16], index: 7, kind: input, shape index: {}]
  %s8 = inlined_call_operand.vmem [shape: f32[2,2,1,16], index: 8, kind: input, shape index: {}]
  %s9 = inlined_call_operand.vmem [shape: f32[2,2,1,16], index: 9, kind: input, shape index: {}]
  %s10 = inlined_call_operand.vmem [shape: bf16[2,32,32], index: 10, kind: input, shape index: {}]
  %s11 = inlined_call_operand.vmem [shape: f32[2,1,32], index: 11, kind: input, shape index: {}]
  %s12 = inlined_call_operand.vmem [shape: f32[2,1,32], index: 12, kind: input, shape index: {}]
  %s13 = inlined_call_operand.vmem [shape: f32[2,1,32], index: 13, kind: input, shape index: {}]
  %s14 = inlined_call_operand.vmem [shape: bf16[2,32,64], index: 14, kind: input, shape index: {}]
  %s15 = inlined_call_operand.vmem [shape: f32[2,1,64], index: 15, kind: input, shape index: {}]
  %s16 = inlined_call_operand.vmem [shape: bf16[2,64,32], index: 16, kind: input, shape index: {}]
  %s17 = inlined_call_operand.vmem [shape: f32[2,1,32], index: 17, kind: input, shape index: {}]
  %s18 = inlined_call_operand.vmem [shape: f32[2,1,32], index: 18, kind: input, shape index: {}]
  %s19 = inlined_call_operand.vmem [shape: f32[2,1,32], index: 19, kind: input, shape index: {}]
  %s20 = inlined_call_operand.vmem [shape: bf16[32,32], index: 20, kind: input, shape index: {}]
  %s21 = inlined_call_operand.vmem [shape: f32[1,32], index: 21, kind: input, shape index: {}]
  %s22 = inlined_call_operand.vmem [shape: bf16[32,8], index: 22, kind: input, shape index: {}]
  %s23 = inlined_call_operand.vmem [shape: f32[1,8], index: 23, kind: input, shape index: {}]
  %s24 = inlined_call_operand.hbm [shape: f32[2,8], index: 24, kind: output, shape index: {0}]
  %s25 = inlined_call_operand.hbm [shape: f32[2,8], index: 25, kind: output, shape index: {1}]
  %26 = xla_tuple %s24, %s25
  %s27 = sld [smem:[#allocation0]]
  $region114: #{tpu_custom_call.1} parent=0
    _
  %s29 = ssub.s32 1, %s27
  %s30 = scalar_select 0, %s29, %s27
  $region1: #{tpu_custom_call.1} parent=0
    #allocation2 [shape = 'u8[1024]{0}', space=vmem, size = 0x400, scoped, tag = 'output window, operand 0, single buffered']
    #allocation3 [shape = 's32[1]{0}', space=sflag, size = 0x4, scoped, tag = 'scoped memory for tpu_custom_call.1']
    #allocation4 [shape = 'u8[1024]{0}', space=vmem, size = 0x400, scoped, tag = 'output window, operand 1, single buffered']
    #allocation5 [shape = 's32[1]{0}', space=sflag, size = 0x4, scoped, tag = 'scoped memory for tpu_custom_call.1']
    %31 = vsyncpa [#allocation3], 0
    %32 = vsyncpa [#allocation5], 0
    // Predicated region
    $region2: #{tpu_custom_call.1} parent=1 // pred_check
      _
    $region3: #{tpu_custom_call.1} parent=1 // pred_check_branch
      %34 = sbr.rel (0) target = $region5
    $region4: #{tpu_custom_call.1} parent=1 // pred_region
      _
    $region5: #{tpu_custom_call.1} parent=1 // pred_fallthru
      _
    // Predicated region
    $region6: #{tpu_custom_call.1} parent=1 // pred_check
      _
    $region7: #{tpu_custom_call.1} parent=1 // pred_check_branch
      %36 = sbr.rel (0) target = $region9
    $region8: #{tpu_custom_call.1} parent=1 // pred_region
      _
    $region9: #{tpu_custom_call.1} parent=1 // pred_fallthru
      _
    // Predicated region
    $region10: #{tpu_custom_call.1} parent=1 // pred_check
      _
    $region11: #{tpu_custom_call.1} parent=1 // pred_check_branch
      %38 = sbr.rel (0) target = $region13
    $region12: #{tpu_custom_call.1} parent=1 // pred_region
      _
    $region13: #{tpu_custom_call.1} parent=1 // pred_fallthru
      _
    // Predicated region
    $region14: #{tpu_custom_call.1} parent=1 // pred_check
      _
    $region15: #{tpu_custom_call.1} parent=1 // pred_check_branch
      %40 = sbr.rel (0) target = $region17
    $region16: #{tpu_custom_call.1} parent=1 // pred_region
      _
    $region17: #{tpu_custom_call.1} parent=1 // pred_fallthru
      _
    // Predicated region
    $region18: #{tpu_custom_call.1} parent=1 // pred_check
      _
    $region19: #{tpu_custom_call.1} parent=1 // pred_check_branch
      %42 = sbr.rel (0) target = $region21
    $region20: #{tpu_custom_call.1} parent=1 // pred_region
      _
    $region21: #{tpu_custom_call.1} parent=1 // pred_fallthru
      _
    // Predicated region
    $region22: #{tpu_custom_call.1} parent=1 // pred_check
      _
    $region23: #{tpu_custom_call.1} parent=1 // pred_check_branch
      %44 = sbr.rel (0) target = $region25
    $region24: #{tpu_custom_call.1} parent=1 // pred_region
      _
    $region25: #{tpu_custom_call.1} parent=1 // pred_fallthru
      _
    // Predicated region
    $region26: #{tpu_custom_call.1} parent=1 // pred_check
      _
    $region27: #{tpu_custom_call.1} parent=1 // pred_check_branch
      %46 = sbr.rel (0) target = $region29
    $region28: #{tpu_custom_call.1} parent=1 // pred_region
      _
    $region29: #{tpu_custom_call.1} parent=1 // pred_fallthru
      _
    // Predicated region
    $region30: #{tpu_custom_call.1} parent=1 // pred_check
      _
    $region31: #{tpu_custom_call.1} parent=1 // pred_check_branch
      %48 = sbr.rel (0) target = $region33
    $region32: #{tpu_custom_call.1} parent=1 // pred_region
      _
    $region33: #{tpu_custom_call.1} parent=1 // pred_fallthru
      _
    // Predicated region
    $region34: #{tpu_custom_call.1} parent=1 // pred_check
      _
    $region35: #{tpu_custom_call.1} parent=1 // pred_check_branch
      %50 = sbr.rel (0) target = $region37
    $region36: #{tpu_custom_call.1} parent=1 // pred_region
      _
    $region37: #{tpu_custom_call.1} parent=1 // pred_fallthru
      _
    // Predicated region
    $region38: #{tpu_custom_call.1} parent=1 // pred_check
      _
    $region39: #{tpu_custom_call.1} parent=1 // pred_check_branch
      %52 = sbr.rel (0) target = $region41
    $region40: #{tpu_custom_call.1} parent=1 // pred_region
      _
    $region41: #{tpu_custom_call.1} parent=1 // pred_fallthru
      _
    // Predicated region
    $region42: #{tpu_custom_call.1} parent=1 // pred_check
      _
    $region43: #{tpu_custom_call.1} parent=1 // pred_check_branch
      %54 = sbr.rel (0) target = $region45
    $region44: #{tpu_custom_call.1} parent=1 // pred_region
      _
    $region45: #{tpu_custom_call.1} parent=1 // pred_fallthru
      _
    // Predicated region
    $region46: #{tpu_custom_call.1} parent=1 // pred_check
      _
    $region47: #{tpu_custom_call.1} parent=1 // pred_check_branch
      %56 = sbr.rel (0) target = $region49
    $region48: #{tpu_custom_call.1} parent=1 // pred_region
      _
    $region49: #{tpu_custom_call.1} parent=1 // pred_fallthru
      _
    // Predicated region
    $region50: #{tpu_custom_call.1} parent=1 // pred_check
      _
    $region51: #{tpu_custom_call.1} parent=1 // pred_check_branch
      %58 = sbr.rel (0) target = $region53
    $region52: #{tpu_custom_call.1} parent=1 // pred_region
      _
    $region53: #{tpu_custom_call.1} parent=1 // pred_fallthru
      _
    // Predicated region
    $region54: #{tpu_custom_call.1} parent=1 // pred_check
      _
    $region55: #{tpu_custom_call.1} parent=1 // pred_check_branch
      %60 = sbr.rel (0) target = $region57
    $region56: #{tpu_custom_call.1} parent=1 // pred_region
      _
    $region57: #{tpu_custom_call.1} parent=1 // pred_fallthru
      _
    // Predicated region
    $region58: #{tpu_custom_call.1} parent=1 // pred_check
      _
    $region59: #{tpu_custom_call.1} parent=1 // pred_check_branch
      %62 = sbr.rel (0) target = $region61
    $region60: #{tpu_custom_call.1} parent=1 // pred_region
      _
    $region61: #{tpu_custom_call.1} parent=1 // pred_fallthru
      _
    // Predicated region
    $region62: #{tpu_custom_call.1} parent=1 // pred_check
      _
    $region63: #{tpu_custom_call.1} parent=1 // pred_check_branch
      %64 = sbr.rel (0) target = $region65
    $region64: #{tpu_custom_call.1} parent=1 // pred_region
      _
    $region65: #{tpu_custom_call.1} parent=1 // pred_fallthru
      _
    // Predicated region
    $region66: #{tpu_custom_call.1} parent=1 // pred_check
      _
    $region67: #{tpu_custom_call.1} parent=1 // pred_check_branch
      %66 = sbr.rel (0) target = $region69
    $region68: #{tpu_custom_call.1} parent=1 // pred_region
      _
    $region69: #{tpu_custom_call.1} parent=1 // pred_fallthru
      _
    // Predicated region
    $region70: #{tpu_custom_call.1} parent=1 // pred_check
      _
    $region71: #{tpu_custom_call.1} parent=1 // pred_check_branch
      %68 = sbr.rel (0) target = $region73
    $region72: #{tpu_custom_call.1} parent=1 // pred_region
      _
    $region73: #{tpu_custom_call.1} parent=1 // pred_fallthru
      _
    // Predicated region
    $region74: #{tpu_custom_call.1} parent=1 // pred_check
      _
    $region75: #{tpu_custom_call.1} parent=1 // pred_check_branch
      %70 = sbr.rel (0) target = $region77
    $region76: #{tpu_custom_call.1} parent=1 // pred_region
      _
    $region77: #{tpu_custom_call.1} parent=1 // pred_fallthru
      _
    // Predicated region
    $region78: #{tpu_custom_call.1} parent=1 // pred_check
      _
    $region79: #{tpu_custom_call.1} parent=1 // pred_check_branch
      %72 = sbr.rel (0) target = $region81
    $region80: #{tpu_custom_call.1} parent=1 // pred_region
      _
    $region81: #{tpu_custom_call.1} parent=1 // pred_fallthru
      _
    // Predicated region
    $region82: #{tpu_custom_call.1} parent=1 // pred_check
      _
    $region83: #{tpu_custom_call.1} parent=1 // pred_check_branch
      %74 = sbr.rel (0) target = $region85
    $region84: #{tpu_custom_call.1} parent=1 // pred_region
      _
    $region85: #{tpu_custom_call.1} parent=1 // pred_fallthru
      _
    // Predicated region
    $region86: #{tpu_custom_call.1} parent=1 // pred_check
      _
    $region87: #{tpu_custom_call.1} parent=1 // pred_check_branch
      %76 = sbr.rel (0) target = $region89
    $region88: #{tpu_custom_call.1} parent=1 // pred_region
      _
    $region89: #{tpu_custom_call.1} parent=1 // pred_fallthru
      _
    // Predicated region
    $region90: #{tpu_custom_call.1} parent=1 // pred_check
      _
    $region91: #{tpu_custom_call.1} parent=1 // pred_check_branch
      %78 = sbr.rel (0) target = $region93
    $region92: #{tpu_custom_call.1} parent=1 // pred_region
      _
    $region93: #{tpu_custom_call.1} parent=1 // pred_fallthru
      _
    // Predicated region
    $region94: #{tpu_custom_call.1} parent=1 // pred_check
      _
    $region95: #{tpu_custom_call.1} parent=1 // pred_check_branch
      %80 = sbr.rel (0) target = $region97
    $region96: #{tpu_custom_call.1} parent=1 // pred_region
      _
    $region97: #{tpu_custom_call.1} parent=1 // pred_fallthru
      _
    %v82 = vld [vmem:[%s0] sm:$0xff]
    %v83 = vld [vmem:[%s0 + $0x8] sm:$0xff]
    %v84 = vld [vmem:[%s2] sm:$0x1]
    %v85 = vld [vmem:[%s3] sm:$0x1]
    %vm86 = vcmask 261120
    %v87 = vsel %vm86, %v82, 0.0
    %88 = vadd.xlane.f32.xlu0 %v87
    %v89 = vpop.xlane.xlu0 %88
    %v90 = vsel %vm86, %v83, 0.0
    %91 = vadd.xlane.f32.xlu0 %v90
    %v92 = vpop.xlane.xlu0 %91
    %v93 = vrcp.pop 32.0
    %v94 = vmul.f32 32.0, %v93
    %v95 = vsub.f32 1.0, %v94
    %v96 = vmul.f32 %v93, %v95
    %v97 = vadd.f32 %v93, %v96
    %vm98 = vweird.f32 %v93
    %v99 = vsel %vm98, %v93, %v97
    %v100 = vmul.f32 %v89, %v99
    %v101 = vmul.f32 %v92, %v99
    %v102 = vsub.f32 %v82, %v100
    %v103 = vsub.f32 %v83, %v101
    %v104 = vmul.f32 %v102, %v102
    %v105 = vmul.f32 %v103, %v103
    %v106 = vsel %vm86, %v104, 0.0
    %107 = vadd.xlane.f32.xlu0 %v106
    %v108 = vpop.xlane.xlu0 %107
    %v109 = vsel %vm86, %v105, 0.0
    %110 = vadd.xlane.f32.xlu0 %v109
    %v111 = vpop.xlane.xlu0 %110
    %v112 = vmul.f32 %v108, %v99
    %v113 = vmul.f32 %v111, %v99
    %v114 = vadd.f32 %v112, 1e-12
    %v115 = vadd.f32 %v113, 1e-12
    %v116 = vrsqrt.pop %v114
    %v117 = vmul.f32 %v116, %v114
    %v118 = vmul.f32 %v117, %v116
    %v119 = vmul.f32 0.5, %v118
    %v120 = vsub.f32 1.5, %v119
    %v121 = vmul.f32 %v116, %v120
    %vm122 = vweird.f32 %v114
    %vm123 = vweird.f32 %v116
    %vm124 = vmor %vm122, %vm123
    %v125 = vsel %vm124, %v116, %v121
    %v126 = vrsqrt.pop %v115
    %v127 = vmul.f32 %v126, %v115
    %v128 = vmul.f32 %v127, %v126
    %v129 = vmul.f32 0.5, %v128
    %v130 = vsub.f32 1.5, %v129
    %v131 = vmul.f32 %v126, %v130
    %vm132 = vweird.f32 %v115
    %vm133 = vweird.f32 %v126
    %vm134 = vmor %vm132, %vm133
    %v135 = vsel %vm134, %v126, %v131
    %v136 = vmul.f32 %v102, %v125
    %v137 = vmul.f32 %v103, %v135
    %v139 = vperm.slane %v84, 0
    %v141 = vmul.f32 %v136, %v139
    %v142 = vmul.f32 %v137, %v139
    %v144 = vperm.slane %v85, 0
    %v146 = vadd.f32 %v141, %v144
    %v147 = vadd.f32 %v142, %v144
    %v148 = vld [vmem:[%s1] sm:$0xff]
    %v149 = vld [vmem:[%s1 + $0x8] sm:$0xff]
    %v150 = vpack.c.bf16 %v147, %v146
    %v151 = vld [vmem:[%s4] sm:$0xf]
    %v152 = vld [vmem:[%s4 + $0x4] sm:$0xf]
    %v153 = vld [vmem:[%s4 + $0x8] sm:$0xf]
    %v154 = vld [vmem:[%s4 + $0xc] sm:$0xf]
    %v155 = vld [vmem:[%s7] sm:$0x1]
    %v157 = vperm.slane %v155, 0
    %v163 = vunpack.c.l.b16 %v151
    %v164 = vunpack.c.l.b16 %v152
    %v165 = vunpack.c.l.b16 %v153
    %v166 = vunpack.c.l.b16 %v154
    %v167 = vpack.c.b16 %v164, %v163
    %v168 = vpack.c.b16 %v166, %v165
    %v172 = vsel %vm86, %v150, 0
    %174 = vmatpush.bf16.msra.mxu0 0
    %175 = vmatpush.bf16.msra.mxu0 0
    %176 = vmatpush.bf16.msra.mxu0 0
    %177 = vmatpush.bf16.msra.mxu0 0
    %178 = vmatpush.bf16.msra.mxu0 0
    %179 = vmatpush.bf16.msra.mxu0 0
    %180 = vmatpush.bf16.msra.mxu0 %v168
    %181 = vmatpush.bf16.msra.mxu0 %v167
    %182 = vmatmul.bf16.gmra.mxu0 %v172
    %v183 = vpop.f32.mrf.mxu0
    %v184 = vadd.f32 %v157, %v183
    %v185 = vpop.f32.mrf.mxu0
    %v186 = vadd.f32 %v157, %v185
    %187 = vdwg.mxu0
    %v188 = vld [vmem:[%s5] sm:$0xf]
    %v189 = vld [vmem:[%s5 + $0x4] sm:$0xf]
    %v190 = vld [vmem:[%s5 + $0x8] sm:$0xf]
    %v191 = vld [vmem:[%s5 + $0xc] sm:$0xf]
    %v192 = vld [vmem:[%s8] sm:$0x1]
    %v194 = vperm.slane %v192, 0
    %v200 = vunpack.c.l.b16 %v188
    %v201 = vunpack.c.l.b16 %v189
    %v202 = vunpack.c.l.b16 %v190
    %v203 = vunpack.c.l.b16 %v191
    %v204 = vpack.c.b16 %v201, %v200
    %v205 = vpack.c.b16 %v203, %v202
    %208 = vmatpush.bf16.msra.mxu0 0
    %209 = vmatpush.bf16.msra.mxu0 0
    %210 = vmatpush.bf16.msra.mxu0 0
    %211 = vmatpush.bf16.msra.mxu0 0
    %212 = vmatpush.bf16.msra.mxu0 0
    %213 = vmatpush.bf16.msra.mxu0 0
    %214 = vmatpush.bf16.msra.mxu0 %v205
    %215 = vmatpush.bf16.msra.mxu0 %v204
    %216 = vmatmul.bf16.gmra.mxu0 %v172
    %v217 = vpop.f32.mrf.mxu0
    %v218 = vadd.f32 %v194, %v217
    %v219 = vpop.f32.mrf.mxu0
    %v220 = vadd.f32 %v194, %v219
    %221 = vdwg.mxu0
    %v222 = vld [vmem:[%s6] sm:$0xf]
    %v223 = vld [vmem:[%s6 + $0x4] sm:$0xf]
    %v224 = vld [vmem:[%s6 + $0x8] sm:$0xf]
    %v225 = vld [vmem:[%s6 + $0xc] sm:$0xf]
    %v226 = vld [vmem:[%s9] sm:$0x1]
    %v228 = vperm.slane %v226, 0
    %v234 = vunpack.c.l.b16 %v222
    %v235 = vunpack.c.l.b16 %v223
    %v236 = vunpack.c.l.b16 %v224
    %v237 = vunpack.c.l.b16 %v225
    %v238 = vpack.c.b16 %v235, %v234
    %v239 = vpack.c.b16 %v237, %v236
    %242 = vmatpush.bf16.msra.mxu0 0
    %243 = vmatpush.bf16.msra.mxu0 0
    %244 = vmatpush.bf16.msra.mxu0 0
    %245 = vmatpush.bf16.msra.mxu0 0
    %246 = vmatpush.bf16.msra.mxu0 0
    %247 = vmatpush.bf16.msra.mxu0 0
    %248 = vmatpush.bf16.msra.mxu0 %v239
    %249 = vmatpush.bf16.msra.mxu0 %v238
    %250 = vmatmul.bf16.gmra.mxu0 %v172
    %v251 = vpop.f32.mrf.mxu0
    %v252 = vadd.f32 %v228, %v251
    %v253 = vpop.f32.mrf.mxu0
    %v254 = vadd.f32 %v228, %v253
    %255 = vdwg.mxu0
    %v256 = vpack.c.bf16 %v186, %v184
    %v257 = vpack.c.bf16 %v220, %v218
    %vm258 = vcmask 130048
    %v260 = vsel %vm258, %v256, 0
    %v263 = vsel %vm258, %v257, 0
    %265 = vmatpush.bf16.xpose.msra.mxu0 0
    %266 = vmatpush.bf16.xpose.msra.mxu0 0
    %267 = vmatpush.bf16.xpose.msra.mxu0 0
    %268 = vmatpush.bf16.xpose.msra.mxu0 0
    %269 = vmatpush.bf16.xpose.msra.mxu0 0
    %270 = vmatpush.bf16.xpose.msra.mxu0 0
    %271 = vmatpush.bf16.xpose.msra.mxu0 0
    %272 = vmatpush.bf16.xpose.msra.mxu0 %v263
    %273 = vmatmul.bf16.gmra.mxu0 %v260
    %v274 = vpop.f32.mrf.mxu0
    %v275 = vadd.f32 0.0, %v274
    %v276 = vpop.f32.mrf.mxu0
    %v277 = vadd.f32 0.0, %v276
    %278 = vdwg.mxu0
    %v279 = vmul.f32 %v275, 0.25
    %v280 = vmul.f32 %v277, 0.25
    %v281 = vadd.f32 %v279, %v148
    %v282 = vadd.f32 %v280, %v149
    %v283 = vsel %vm258, %v281, -inf
    %284 = vmax.xlane.f32.xlu0 %v283
    %v285 = vpop.xlane.xlu0 %284
    %v286 = vsel %vm258, %v282, -inf
    %287 = vmax.xlane.f32.xlu0 %v286
    %v288 = vpop.xlane.xlu0 %287
    %v289 = vsub.f32 %v281, %v285
    %v290 = vsub.f32 %v282, %v288
    %v291 = vmul.f32 %v289, 1.442695
    %v292 = vpow.pop %v291
    %v293 = vmul.f32 %v290, 1.442695
    %v294 = vpow.pop %v293
    %v295 = vsel %vm258, %v292, 0.0
    %296 = vadd.xlane.f32.xlu0 %v295
    %v297 = vpop.xlane.xlu0 %296
    %v298 = vsel %vm258, %v294, 0.0
    %299 = vadd.xlane.f32.xlu0 %v298
    %v300 = vpop.xlane.xlu0 %299
    %v301 = vrcp.pop %v297
    %v302 = vrcp.pop %v300
    %v303 = vmul.f32 %v292, %v301
    %v304 = vmul.f32 %v294, %v302
    %v305 = vpack.c.bf16 %v304, %v303
    %v306 = vpack.c.bf16 %v254, %v252
    %v308 = vsel %vm258, %v305, 0
    %310 = vmatpush.bf16.msra.mxu0 0
    %311 = vmatpush.bf16.msra.mxu0 0
    %312 = vmatpush.bf16.msra.mxu0 0
    %313 = vmatpush.bf16.msra.mxu0 0
    %314 = vmatpush.bf16.msra.mxu0 0
    %315 = vmatpush.bf16.msra.mxu0 0
    %316 = vmatpush.bf16.msra.mxu0 0
    %317 = vmatpush.bf16.msra.mxu0 %v306
    %318 = vmatmul.bf16.gmra.mxu0 %v308
    %v319 = vpop.f32.mrf.mxu0
    %v320 = vadd.f32 0.0, %v319
    %v321 = vpop.f32.mrf.mxu0
    %v322 = vadd.f32 0.0, %v321
    %323 = vdwg.mxu0
    %s324 = scalar_lea.vmem %s4, 16
    %v325 = vld [vmem:[%s324] sm:$0xf]
    %v326 = vld [vmem:[%s324 + $0x4] sm:$0xf]
    %v327 = vld [vmem:[%s324 + $0x8] sm:$0xf]
    %v328 = vld [vmem:[%s324 + $0xc] sm:$0xf]
    %s329 = scalar_lea.vmem %s7, 1
    %v330 = vld [vmem:[%s329] sm:$0x1]
    %v332 = vperm.slane %v330, 0
    %v338 = vunpack.c.l.b16 %v325
    %v339 = vunpack.c.l.b16 %v326
    %v340 = vunpack.c.l.b16 %v327
    %v341 = vunpack.c.l.b16 %v328
    %v342 = vpack.c.b16 %v339, %v338
    %v343 = vpack.c.b16 %v341, %v340
    %346 = vmatpush.bf16.msra.mxu0 0
    %347 = vmatpush.bf16.msra.mxu0 0
    %348 = vmatpush.bf16.msra.mxu0 0
    %349 = vmatpush.bf16.msra.mxu0 0
    %350 = vmatpush.bf16.msra.mxu0 0
    %351 = vmatpush.bf16.msra.mxu0 0
    %352 = vmatpush.bf16.msra.mxu0 %v343
    %353 = vmatpush.bf16.msra.mxu0 %v342
    %354 = vmatmul.bf16.gmra.mxu0 %v172
    %v355 = vpop.f32.mrf.mxu0
    %v356 = vadd.f32 %v332, %v355
    %v357 = vpop.f32.mrf.mxu0
    %v358 = vadd.f32 %v332, %v357
    %359 = vdwg.mxu0
    %s360 = scalar_lea.vmem %s5, 16
    %v361 = vld [vmem:[%s360] sm:$0xf]
    %v362 = vld [vmem:[%s360 + $0x4] sm:$0xf]
    %v363 = vld [vmem:[%s360 + $0x8] sm:$0xf]
    %v364 = vld [vmem:[%s360 + $0xc] sm:$0xf]
    %s365 = scalar_lea.vmem %s8, 1
    %v366 = vld [vmem:[%s365] sm:$0x1]
    %v368 = vperm.slane %v366, 0
    %v374 = vunpack.c.l.b16 %v361
    %v375 = vunpack.c.l.b16 %v362
    %v376 = vunpack.c.l.b16 %v363
    %v377 = vunpack.c.l.b16 %v364
    %v378 = vpack.c.b16 %v375, %v374
    %v379 = vpack.c.b16 %v377, %v376
    %382 = vmatpush.bf16.msra.mxu0 0
    %383 = vmatpush.bf16.msra.mxu0 0
    %384 = vmatpush.bf16.msra.mxu0 0
    %385 = vmatpush.bf16.msra.mxu0 0
    %386 = vmatpush.bf16.msra.mxu0 0
    %387 = vmatpush.bf16.msra.mxu0 0
    %388 = vmatpush.bf16.msra.mxu0 %v379
    %389 = vmatpush.bf16.msra.mxu0 %v378
    %390 = vmatmul.bf16.gmra.mxu0 %v172
    %v391 = vpop.f32.mrf.mxu0
    %v392 = vadd.f32 %v368, %v391
    %v393 = vpop.f32.mrf.mxu0
    %v394 = vadd.f32 %v368, %v393
    %395 = vdwg.mxu0
    %s396 = scalar_lea.vmem %s6, 16
    %v397 = vld [vmem:[%s396] sm:$0xf]
    %v398 = vld [vmem:[%s396 + $0x4] sm:$0xf]
    %v399 = vld [vmem:[%s396 + $0x8] sm:$0xf]
    %v400 = vld [vmem:[%s396 + $0xc] sm:$0xf]
    %s401 = scalar_lea.vmem %s9, 1
    %v402 = vld [vmem:[%s401] sm:$0x1]
    %v404 = vperm.slane %v402, 0
    %v410 = vunpack.c.l.b16 %v397
    %v411 = vunpack.c.l.b16 %v398
    %v412 = vunpack.c.l.b16 %v399
    %v413 = vunpack.c.l.b16 %v400
    %v414 = vpack.c.b16 %v411, %v410
    %v415 = vpack.c.b16 %v413, %v412
    %418 = vmatpush.bf16.msra.mxu0 0
    %419 = vmatpush.bf16.msra.mxu0 0
    %420 = vmatpush.bf16.msra.mxu0 0
    %421 = vmatpush.bf16.msra.mxu0 0
    %422 = vmatpush.bf16.msra.mxu0 0
    %423 = vmatpush.bf16.msra.mxu0 0
    %424 = vmatpush.bf16.msra.mxu0 %v415
    %425 = vmatpush.bf16.msra.mxu0 %v414
    %426 = vmatmul.bf16.gmra.mxu0 %v172
    %v427 = vpop.f32.mrf.mxu0
    %v428 = vadd.f32 %v404, %v427
    %v429 = vpop.f32.mrf.mxu0
    %v430 = vadd.f32 %v404, %v429
    %431 = vdwg.mxu0
    %v432 = vpack.c.bf16 %v358, %v356
    %v433 = vpack.c.bf16 %v394, %v392
    %v435 = vsel %vm258, %v432, 0
    %v438 = vsel %vm258, %v433, 0
    %440 = vmatpush.bf16.xpose.msra.mxu0 0
    %441 = vmatpush.bf16.xpose.msra.mxu0 0
    %442 = vmatpush.bf16.xpose.msra.mxu0 0
    %443 = vmatpush.bf16.xpose.msra.mxu0 0
    %444 = vmatpush.bf16.xpose.msra.mxu0 0
    %445 = vmatpush.bf16.xpose.msra.mxu0 0
    %446 = vmatpush.bf16.xpose.msra.mxu0 0
    %447 = vmatpush.bf16.xpose.msra.mxu0 %v438
    %448 = vmatmul.bf16.gmra.mxu0 %v435
    %v449 = vpop.f32.mrf.mxu0
    %v450 = vadd.f32 0.0, %v449
    %v451 = vpop.f32.mrf.mxu0
    %v452 = vadd.f32 0.0, %v451
    %453 = vdwg.mxu0
    %v454 = vmul.f32 %v450, 0.25
    %v455 = vmul.f32 %v452, 0.25
    %v456 = vadd.f32 %v454, %v148
    %v457 = vadd.f32 %v455, %v149
    %v458 = vsel %vm258, %v456, -inf
    %459 = vmax.xlane.f32.xlu0 %v458
    %v460 = vpop.xlane.xlu0 %459
    %v461 = vsel %vm258, %v457, -inf
    %462 = vmax.xlane.f32.xlu0 %v461
    %v463 = vpop.xlane.xlu0 %462
    %v464 = vsub.f32 %v456, %v460
    %v465 = vsub.f32 %v457, %v463
    %v466 = vmul.f32 %v464, 1.442695
    %v467 = vpow.pop %v466
    %v468 = vmul.f32 %v465, 1.442695
    %v469 = vpow.pop %v468
    %v470 = vsel %vm258, %v467, 0.0
    %471 = vadd.xlane.f32.xlu0 %v470
    %v472 = vpop.xlane.xlu0 %471
    %v473 = vsel %vm258, %v469, 0.0
    %474 = vadd.xlane.f32.xlu0 %v473
    %v475 = vpop.xlane.xlu0 %474
    %v476 = vrcp.pop %v472
    %v477 = vrcp.pop %v475
    %v478 = vmul.f32 %v467, %v476
    %v479 = vmul.f32 %v469, %v477
    %v480 = vpack.c.bf16 %v479, %v478
    %v481 = vpack.c.bf16 %v430, %v428
    %v483 = vsel %vm258, %v480, 0
    %485 = vmatpush.bf16.msra.mxu0 0
    %486 = vmatpush.bf16.msra.mxu0 0
    %487 = vmatpush.bf16.msra.mxu0 0
    %488 = vmatpush.bf16.msra.mxu0 0
    %489 = vmatpush.bf16.msra.mxu0 0
    %490 = vmatpush.bf16.msra.mxu0 0
    %491 = vmatpush.bf16.msra.mxu0 0
    %492 = vmatpush.bf16.msra.mxu0 %v481
    %493 = vmatmul.bf16.gmra.mxu0 %v483
    %v494 = vpop.f32.mrf.mxu0
    %v495 = vadd.f32 0.0, %v494
    %v496 = vpop.f32.mrf.mxu0
    %v497 = vadd.f32 0.0, %v496
    %498 = vdwg.mxu0
    %501 = vrot.lane.b32.xlu0 %v495, 16
    %v502 = vpop.permute.xlu0 %501
    %503 = vrot.lane.b32.xlu0 %v497, 16
    %v504 = vpop.permute.xlu0 %503
    %v507 = vsel %vm258, %v320, %v502
    %v508 = vsel %vm258, %v322, %v504
    %v509 = vpack.c.bf16 %v508, %v507
    %v510 = vld [vmem:[%s10] sm:$0xf]
    %v511 = vld [vmem:[%s10 + $0x4] sm:$0xf]
    %v512 = vld [vmem:[%s10 + $0x8] sm:$0xf]
    %v513 = vld [vmem:[%s10 + $0xc] sm:$0xf]
    %v514 = vld [vmem:[%s11] sm:$0x1]
    %v516 = vperm.slane %v514, 0
    %v522 = vunpack.c.l.b16 %v510
    %v523 = vunpack.c.l.b16 %v511
    %v524 = vunpack.c.l.b16 %v512
    %v525 = vunpack.c.l.b16 %v513
    %v526 = vpack.c.b16 %v523, %v522
    %v527 = vpack.c.b16 %v525, %v524
    %v531 = vsel %vm86, %v509, 0
    %533 = vmatpush.bf16.msra.mxu0 0
    %534 = vmatpush.bf16.msra.mxu0 0
    %535 = vmatpush.bf16.msra.mxu0 0
    %536 = vmatpush.bf16.msra.mxu0 0
    %537 = vmatpush.bf16.msra.mxu0 0
    %538 = vmatpush.bf16.msra.mxu0 0
    %539 = vmatpush.bf16.msra.mxu0 %v527
    %540 = vmatpush.bf16.msra.mxu0 %v526
    %541 = vmatmul.bf16.gmra.mxu0 %v531
    %v542 = vpop.f32.mrf.mxu0
    %v543 = vadd.f32 %v516, %v542
    %v544 = vpop.f32.mrf.mxu0
    %v545 = vadd.f32 %v516, %v544
    %546 = vdwg.mxu0
    %v547 = vadd.f32 %v146, %v543
    %v548 = vadd.f32 %v147, %v545
    %v549 = vld [vmem:[%s12] sm:$0x1]
    %v550 = vld [vmem:[%s13] sm:$0x1]
    %v551 = vsel %vm86, %v547, 0.0
    %552 = vadd.xlane.f32.xlu0 %v551
    %v553 = vpop.xlane.xlu0 %552
    %v554 = vsel %vm86, %v548, 0.0
    %555 = vadd.xlane.f32.xlu0 %v554
    %v556 = vpop.xlane.xlu0 %555
    %v557 = vmul.f32 %v553, %v99
    %v558 = vmul.f32 %v556, %v99
    %v559 = vsub.f32 %v547, %v557
    %v560 = vsub.f32 %v548, %v558
    %v561 = vmul.f32 %v559, %v559
    %v562 = vmul.f32 %v560, %v560
    %v563 = vsel %vm86, %v561, 0.0
    %564 = vadd.xlane.f32.xlu0 %v563
    %v565 = vpop.xlane.xlu0 %564
    %v566 = vsel %vm86, %v562, 0.0
    %567 = vadd.xlane.f32.xlu0 %v566
    %v568 = vpop.xlane.xlu0 %567
    %v569 = vmul.f32 %v565, %v99
    %v570 = vmul.f32 %v568, %v99
    %v571 = vadd.f32 %v569, 1e-12
    %v572 = vadd.f32 %v570, 1e-12
    %v573 = vrsqrt.pop %v571
    %v574 = vmul.f32 %v573, %v571
    %v575 = vmul.f32 %v574, %v573
    %v576 = vmul.f32 0.5, %v575
    %v577 = vsub.f32 1.5, %v576
    %v578 = vmul.f32 %v573, %v577
    %vm579 = vweird.f32 %v571
    %vm580 = vweird.f32 %v573
    %vm581 = vmor %vm579, %vm580
    %v582 = vsel %vm581, %v573, %v578
    %v583 = vrsqrt.pop %v572
    %v584 = vmul.f32 %v583, %v572
    %v585 = vmul.f32 %v584, %v583
    %v586 = vmul.f32 0.5, %v585
    %v587 = vsub.f32 1.5, %v586
    %v588 = vmul.f32 %v583, %v587
    %vm589 = vweird.f32 %v572
    %vm590 = vweird.f32 %v583
    %vm591 = vmor %vm589, %vm590
    %v592 = vsel %vm591, %v583, %v588
    %v593 = vmul.f32 %v559, %v582
    %v594 = vmul.f32 %v560, %v592
    %v596 = vperm.slane %v549, 0
    %v598 = vmul.f32 %v593, %v596
    %v599 = vmul.f32 %v594, %v596
    %v601 = vperm.slane %v550, 0
    %v603 = vadd.f32 %v598, %v601
    %v604 = vadd.f32 %v599, %v601
    %v605 = vpack.c.bf16 %v604, %v603
    %v606 = vld [vmem:[%s14] sm:$0xf]
    %v607 = vld [vmem:[%s14 + $0x4] sm:$0xf]
    %v608 = vld [vmem:[%s14 + $0x8] sm:$0xf]
    %v609 = vld [vmem:[%s14 + $0xc] sm:$0xf]
    %v610 = vld [vmem:[%s15] sm:$0x1]
    %v612 = vperm.slane %v610, 0
    %v618 = vunpack.c.l.b16 %v606
    %v619 = vunpack.c.l.b16 %v607
    %v620 = vunpack.c.l.b16 %v608
    %v621 = vunpack.c.l.b16 %v609
    %v622 = vpack.c.b16 %v619, %v618
    %v623 = vpack.c.b16 %v621, %v620
    %v627 = vsel %vm86, %v605, 0
    %629 = vmatpush.bf16.msra.mxu0 0
    %630 = vmatpush.bf16.msra.mxu0 0
    %631 = vmatpush.bf16.msra.mxu0 0
    %632 = vmatpush.bf16.msra.mxu0 0
    %633 = vmatpush.bf16.msra.mxu0 0
    %634 = vmatpush.bf16.msra.mxu0 0
    %635 = vmatpush.bf16.msra.mxu0 %v623
    %636 = vmatpush.bf16.msra.mxu0 %v622
    %637 = vmatmul.bf16.gmra.mxu0 %v627
    %v638 = vpop.f32.mrf.mxu0
    %v639 = vadd.f32 %v612, %v638
    %v640 = vpop.f32.mrf.mxu0
    %v641 = vadd.f32 %v612, %v640
    %642 = vdwg.mxu0
    %v643 = vmul.f32 %v639, %v639
    %v644 = vmul.f32 %v641, %v641
    %v645 = vmul.f32 %v639, %v643
    %v646 = vmul.f32 %v641, %v644
    %v647 = vmul.f32 %v645, 0.044715
    %v648 = vmul.f32 %v646, 0.044715
    %v649 = vadd.f32 %v639, %v647
    %v650 = vadd.f32 %v641, %v648
    %v651 = vmul.f32 %v649, 0.7978846
    %v652 = vmul.f32 %v650, 0.7978846
    %v653 = vtanh.pop %v651
    %v654 = vtanh.pop %v652
    %v655 = vadd.f32 %v653, 1.0
    %v656 = vadd.f32 %v654, 1.0
    %v657 = vmul.f32 %v655, 0.5
    %v658 = vmul.f32 %v656, 0.5
    %v659 = vmul.f32 %v639, %v657
    %v660 = vmul.f32 %v641, %v658
    %v661 = vpack.c.bf16 %v660, %v659
    %v662 = vld [vmem:[%s16] sm:$0xf]
    %v663 = vld [vmem:[%s16 + $0x4] sm:$0xf]
    %v664 = vld [vmem:[%s16 + $0x8] sm:$0xf]
    %v665 = vld [vmem:[%s16 + $0xc] sm:$0xf]
    %v666 = vld [vmem:[%s16 + $0x10] sm:$0xf]
    %v667 = vld [vmem:[%s16 + $0x14] sm:$0xf]
    %v668 = vld [vmem:[%s16 + $0x18] sm:$0xf]
    %v669 = vld [vmem:[%s16 + $0x1c] sm:$0xf]
    %v670 = vld [vmem:[%s17] sm:$0x1]
    %v672 = vperm.slane %v670, 0
    %v682 = vunpack.c.l.b16 %v662
    %v683 = vunpack.c.l.b16 %v663
    %v684 = vunpack.c.l.b16 %v664
    %v685 = vunpack.c.l.b16 %v665
    %v686 = vunpack.c.l.b16 %v666
    %v687 = vunpack.c.l.b16 %v667
    %v688 = vunpack.c.l.b16 %v668
    %v689 = vunpack.c.l.b16 %v669
    %v690 = vpack.c.b16 %v683, %v682
    %v691 = vpack.c.b16 %v685, %v684
    %v692 = vpack.c.b16 %v687, %v686
    %v693 = vpack.c.b16 %v689, %v688
    %vm698 = vcmask 523264
    %v700 = vsel %vm698, %v661, 0
    %702 = vmatpush.bf16.msra.mxu0 0
    %703 = vmatpush.bf16.msra.mxu0 0
    %704 = vmatpush.bf16.msra.mxu0 0
    %705 = vmatpush.bf16.msra.mxu0 0
    %706 = vmatpush.bf16.msra.mxu0 %v693
    %707 = vmatpush.bf16.msra.mxu0 %v692
    %708 = vmatpush.bf16.msra.mxu0 %v691
    %709 = vmatpush.bf16.msra.mxu0 %v690
    %710 = vmatmul.bf16.gmra.mxu0 %v700
    %v711 = vpop.f32.mrf.mxu0
    %v712 = vadd.f32 %v672, %v711
    %v713 = vpop.f32.mrf.mxu0
    %v714 = vadd.f32 %v672, %v713
    %715 = vdwg.mxu0
    %v716 = vadd.f32 %v603, %v712
    %v717 = vadd.f32 %v604, %v714
    %v718 = vld [vmem:[%s18] sm:$0x1]
    %v719 = vld [vmem:[%s19] sm:$0x1]
    %v720 = vsel %vm86, %v716, 0.0
    %721 = vadd.xlane.f32.xlu0 %v720
    %v722 = vpop.xlane.xlu0 %721
    %v723 = vsel %vm86, %v717, 0.0
    %724 = vadd.xlane.f32.xlu0 %v723
    %v725 = vpop.xlane.xlu0 %724
    %v726 = vmul.f32 %v722, %v99
    %v727 = vmul.f32 %v725, %v99
    %v728 = vsub.f32 %v716, %v726
    %v729 = vsub.f32 %v717, %v727
    %v730 = vmul.f32 %v728, %v728
    %v731 = vmul.f32 %v729, %v729
    %v732 = vsel %vm86, %v730, 0.0
    %733 = vadd.xlane.f32.xlu0 %v732
    %v734 = vpop.xlane.xlu0 %733
    %v735 = vsel %vm86, %v731, 0.0
    %736 = vadd.xlane.f32.xlu0 %v735
    %v737 = vpop.xlane.xlu0 %736
    %v738 = vmul.f32 %v734, %v99
    %v739 = vmul.f32 %v737, %v99
    %v740 = vadd.f32 %v738, 1e-12
    %v741 = vadd.f32 %v739, 1e-12
    %v742 = vrsqrt.pop %v740
    %v743 = vmul.f32 %v742, %v740
    %v744 = vmul.f32 %v743, %v742
    %v745 = vmul.f32 0.5, %v744
    %v746 = vsub.f32 1.5, %v745
    %v747 = vmul.f32 %v742, %v746
    %vm748 = vweird.f32 %v740
    %vm749 = vweird.f32 %v742
    %vm750 = vmor %vm748, %vm749
    %v751 = vsel %vm750, %v742, %v747
    %v752 = vrsqrt.pop %v741
    %v753 = vmul.f32 %v752, %v741
    %v754 = vmul.f32 %v753, %v752
    %v755 = vmul.f32 0.5, %v754
    %v756 = vsub.f32 1.5, %v755
    %v757 = vmul.f32 %v752, %v756
    %vm758 = vweird.f32 %v741
    %vm759 = vweird.f32 %v752
    %vm760 = vmor %vm758, %vm759
    %v761 = vsel %vm760, %v752, %v757
    %v762 = vmul.f32 %v728, %v751
    %v763 = vmul.f32 %v729, %v761
    %v765 = vperm.slane %v718, 0
    %v767 = vmul.f32 %v762, %v765
    %v768 = vmul.f32 %v763, %v765
    %v770 = vperm.slane %v719, 0
    %v772 = vadd.f32 %v767, %v770
    %v773 = vadd.f32 %v768, %v770
    %v774 = vpack.c.bf16 %v773, %v772
    %s775 = scalar_lea.vmem %s4, 32
    %v776 = vld [vmem:[%s775] sm:$0xf]
    %v777 = vld [vmem:[%s775 + $0x4] sm:$0xf]
    %v778 = vld [vmem:[%s775 + $0x8] sm:$0xf]
    %v779 = vld [vmem:[%s775 + $0xc] sm:$0xf]
    %s780 = scalar_lea.vmem %s7, 2
    %v781 = vld [vmem:[%s780] sm:$0x1]
    %v783 = vperm.slane %v781, 0
    %v789 = vunpack.c.l.b16 %v776
    %v790 = vunpack.c.l.b16 %v777
    %v791 = vunpack.c.l.b16 %v778
    %v792 = vunpack.c.l.b16 %v779
    %v793 = vpack.c.b16 %v790, %v789
    %v794 = vpack.c.b16 %v792, %v791
    %v798 = vsel %vm86, %v774, 0
    %800 = vmatpush.bf16.msra.mxu0 0
    %801 = vmatpush.bf16.msra.mxu0 0
    %802 = vmatpush.bf16.msra.mxu0 0
    %803 = vmatpush.bf16.msra.mxu0 0
    %804 = vmatpush.bf16.msra.mxu0 0
    %805 = vmatpush.bf16.msra.mxu0 0
    %806 = vmatpush.bf16.msra.mxu0 %v794
    %807 = vmatpush.bf16.msra.mxu0 %v793
    %808 = vmatmul.bf16.gmra.mxu0 %v798
    %v809 = vpop.f32.mrf.mxu0
    %v810 = vadd.f32 %v783, %v809
    %v811 = vpop.f32.mrf.mxu0
    %v812 = vadd.f32 %v783, %v811
    %813 = vdwg.mxu0
    %s814 = scalar_lea.vmem %s5, 32
    %v815 = vld [vmem:[%s814] sm:$0xf]
    %v816 = vld [vmem:[%s814 + $0x4] sm:$0xf]
    %v817 = vld [vmem:[%s814 + $0x8] sm:$0xf]
    %v818 = vld [vmem:[%s814 + $0xc] sm:$0xf]
    %s819 = scalar_lea.vmem %s8, 2
    %v820 = vld [vmem:[%s819] sm:$0x1]
    %v822 = vperm.slane %v820, 0
    %v828 = vunpack.c.l.b16 %v815
    %v829 = vunpack.c.l.b16 %v816
    %v830 = vunpack.c.l.b16 %v817
    %v831 = vunpack.c.l.b16 %v818
    %v832 = vpack.c.b16 %v829, %v828
    %v833 = vpack.c.b16 %v831, %v830
    %836 = vmatpush.bf16.msra.mxu0 0
    %837 = vmatpush.bf16.msra.mxu0 0
    %838 = vmatpush.bf16.msra.mxu0 0
    %839 = vmatpush.bf16.msra.mxu0 0
    %840 = vmatpush.bf16.msra.mxu0 0
    %841 = vmatpush.bf16.msra.mxu0 0
    %842 = vmatpush.bf16.msra.mxu0 %v833
    %843 = vmatpush.bf16.msra.mxu0 %v832
    %844 = vmatmul.bf16.gmra.mxu0 %v798
    %v845 = vpop.f32.mrf.mxu0
    %v846 = vadd.f32 %v822, %v845
    %v847 = vpop.f32.mrf.mxu0
    %v848 = vadd.f32 %v822, %v847
    %849 = vdwg.mxu0
    %s850 = scalar_lea.vmem %s6, 32
    %v851 = vld [vmem:[%s850] sm:$0xf]
    %v852 = vld [vmem:[%s850 + $0x4] sm:$0xf]
    %v853 = vld [vmem:[%s850 + $0x8] sm:$0xf]
    %v854 = vld [vmem:[%s850 + $0xc] sm:$0xf]
    %s855 = scalar_lea.vmem %s9, 2
    %v856 = vld [vmem:[%s855] sm:$0x1]
    %v858 = vperm.slane %v856, 0
    %v864 = vunpack.c.l.b16 %v851
    %v865 = vunpack.c.l.b16 %v852
    %v866 = vunpack.c.l.b16 %v853
    %v867 = vunpack.c.l.b16 %v854
    %v868 = vpack.c.b16 %v865, %v864
    %v869 = vpack.c.b16 %v867, %v866
    %872 = vmatpush.bf16.msra.mxu0 0
    %873 = vmatpush.bf16.msra.mxu0 0
    %874 = vmatpush.bf16.msra.mxu0 0
    %875 = vmatpush.bf16.msra.mxu0 0
    %876 = vmatpush.bf16.msra.mxu0 0
    %877 = vmatpush.bf16.msra.mxu0 0
    %878 = vmatpush.bf16.msra.mxu0 %v869
    %879 = vmatpush.bf16.msra.mxu0 %v868
    %880 = vmatmul.bf16.gmra.mxu0 %v798
    %v881 = vpop.f32.mrf.mxu0
    %v882 = vadd.f32 %v858, %v881
    %v883 = vpop.f32.mrf.mxu0
    %v884 = vadd.f32 %v858, %v883
    %885 = vdwg.mxu0
    %v886 = vpack.c.bf16 %v812, %v810
    %v887 = vpack.c.bf16 %v848, %v846
    %v889 = vsel %vm258, %v886, 0
    %v892 = vsel %vm258, %v887, 0
    %894 = vmatpush.bf16.xpose.msra.mxu0 0
    %895 = vmatpush.bf16.xpose.msra.mxu0 0
    %896 = vmatpush.bf16.xpose.msra.mxu0 0
    %897 = vmatpush.bf16.xpose.msra.mxu0 0
    %898 = vmatpush.bf16.xpose.msra.mxu0 0
    %899 = vmatpush.bf16.xpose.msra.mxu0 0
    %900 = vmatpush.bf16.xpose.msra.mxu0 0
    %901 = vmatpush.bf16.xpose.msra.mxu0 %v892
    %902 = vmatmul.bf16.gmra.mxu0 %v889
    %v903 = vpop.f32.mrf.mxu0
    %v904 = vadd.f32 0.0, %v903
    %v905 = vpop.f32.mrf.mxu0
    %v906 = vadd.f32 0.0, %v905
    %907 = vdwg.mxu0
    %v908 = vmul.f32 %v904, 0.25
    %v909 = vmul.f32 %v906, 0.25
    %v910 = vadd.f32 %v908, %v148
    %v911 = vadd.f32 %v909, %v149
    %v912 = vsel %vm258, %v910, -inf
    %913 = vmax.xlane.f32.xlu0 %v912
    %v914 = vpop.xlane.xlu0 %913
    %v915 = vsel %vm258, %v911, -inf
    %916 = vmax.xlane.f32.xlu0 %v915
    %v917 = vpop.xlane.xlu0 %916
    %v918 = vsub.f32 %v910, %v914
    %v919 = vsub.f32 %v911, %v917
    %v920 = vmul.f32 %v918, 1.442695
    %v921 = vpow.pop %v920
    %v922 = vmul.f32 %v919, 1.442695
    %v923 = vpow.pop %v922
    %v924 = vsel %vm258, %v921, 0.0
    %925 = vadd.xlane.f32.xlu0 %v924
    %v926 = vpop.xlane.xlu0 %925
    %v927 = vsel %vm258, %v923, 0.0
    %928 = vadd.xlane.f32.xlu0 %v927
    %v929 = vpop.xlane.xlu0 %928
    %v930 = vrcp.pop %v926
    %v931 = vrcp.pop %v929
    %v932 = vmul.f32 %v921, %v930
    %v933 = vmul.f32 %v923, %v931
    %v934 = vpack.c.bf16 %v933, %v932
    %v935 = vpack.c.bf16 %v884, %v882
    %v937 = vsel %vm258, %v934, 0
    %939 = vmatpush.bf16.msra.mxu0 0
    %940 = vmatpush.bf16.msra.mxu0 0
    %941 = vmatpush.bf16.msra.mxu0 0
    %942 = vmatpush.bf16.msra.mxu0 0
    %943 = vmatpush.bf16.msra.mxu0 0
    %944 = vmatpush.bf16.msra.mxu0 0
    %945 = vmatpush.bf16.msra.mxu0 0
    %946 = vmatpush.bf16.msra.mxu0 %v935
    %947 = vmatmul.bf16.gmra.mxu0 %v937
    %v948 = vpop.f32.mrf.mxu0
    %v949 = vadd.f32 0.0, %v948
    %v950 = vpop.f32.mrf.mxu0
    %v951 = vadd.f32 0.0, %v950
    %952 = vdwg.mxu0
    %s953 = scalar_lea.vmem %s4, 48
    %v954 = vld [vmem:[%s953] sm:$0xf]
    %v955 = vld [vmem:[%s953 + $0x4] sm:$0xf]
    %v956 = vld [vmem:[%s953 + $0x8] sm:$0xf]
    %v957 = vld [vmem:[%s953 + $0xc] sm:$0xf]
    %s958 = scalar_lea.vmem %s7, 3
    %v959 = vld [vmem:[%s958] sm:$0x1]
    %v961 = vperm.slane %v959, 0
    %v967 = vunpack.c.l.b16 %v954
    %v968 = vunpack.c.l.b16 %v955
    %v969 = vunpack.c.l.b16 %v956
    %v970 = vunpack.c.l.b16 %v957
    %v971 = vpack.c.b16 %v968, %v967
    %v972 = vpack.c.b16 %v970, %v969
    %975 = vmatpush.bf16.msra.mxu0 0
    %976 = vmatpush.bf16.msra.mxu0 0
    %977 = vmatpush.bf16.msra.mxu0 0
    %978 = vmatpush.bf16.msra.mxu0 0
    %979 = vmatpush.bf16.msra.mxu0 0
    %980 = vmatpush.bf16.msra.mxu0 0
    %981 = vmatpush.bf16.msra.mxu0 %v972
    %982 = vmatpush.bf16.msra.mxu0 %v971
    %983 = vmatmul.bf16.gmra.mxu0 %v798
    %v984 = vpop.f32.mrf.mxu0
    %v985 = vadd.f32 %v961, %v984
    %v986 = vpop.f32.mrf.mxu0
    %v987 = vadd.f32 %v961, %v986
    %988 = vdwg.mxu0
    %s989 = scalar_lea.vmem %s5, 48
    %v990 = vld [vmem:[%s989] sm:$0xf]
    %v991 = vld [vmem:[%s989 + $0x4] sm:$0xf]
    %v992 = vld [vmem:[%s989 + $0x8] sm:$0xf]
    %v993 = vld [vmem:[%s989 + $0xc] sm:$0xf]
    %s994 = scalar_lea.vmem %s8, 3
    %v995 = vld [vmem:[%s994] sm:$0x1]
    %v997 = vperm.slane %v995, 0
    %v1003 = vunpack.c.l.b16 %v990
    %v1004 = vunpack.c.l.b16 %v991
    %v1005 = vunpack.c.l.b16 %v992
    %v1006 = vunpack.c.l.b16 %v993
    %v1007 = vpack.c.b16 %v1004, %v1003
    %v1008 = vpack.c.b16 %v1006, %v1005
    %1011 = vmatpush.bf16.msra.mxu0 0
    %1012 = vmatpush.bf16.msra.mxu0 0
    %1013 = vmatpush.bf16.msra.mxu0 0
    %1014 = vmatpush.bf16.msra.mxu0 0
    %1015 = vmatpush.bf16.msra.mxu0 0
    %1016 = vmatpush.bf16.msra.mxu0 0
    %1017 = vmatpush.bf16.msra.mxu0 %v1008
    %1018 = vmatpush.bf16.msra.mxu0 %v1007
    %1019 = vmatmul.bf16.gmra.mxu0 %v798
    %v1020 = vpop.f32.mrf.mxu0
    %v1021 = vadd.f32 %v997, %v1020
    %v1022 = vpop.f32.mrf.mxu0
    %v1023 = vadd.f32 %v997, %v1022
    %1024 = vdwg.mxu0
    %s1025 = scalar_lea.vmem %s6, 48
    %v1026 = vld [vmem:[%s1025] sm:$0xf]
    %v1027 = vld [vmem:[%s1025 + $0x4] sm:$0xf]
    %v1028 = vld [vmem:[%s1025 + $0x8] sm:$0xf]
    %v1029 = vld [vmem:[%s1025 + $0xc] sm:$0xf]
    %s1030 = scalar_lea.vmem %s9, 3
    %v1031 = vld [vmem:[%s1030] sm:$0x1]
    %v1033 = vperm.slane %v1031, 0
    %v1039 = vunpack.c.l.b16 %v1026
    %v1040 = vunpack.c.l.b16 %v1027
    %v1041 = vunpack.c.l.b16 %v1028
    %v1042 = vunpack.c.l.b16 %v1029
    %v1043 = vpack.c.b16 %v1040, %v1039
    %v1044 = vpack.c.b16 %v1042, %v1041
    %1047 = vmatpush.bf16.msra.mxu0 0
    %1048 = vmatpush.bf16.msra.mxu0 0
    %1049 = vmatpush.bf16.msra.mxu0 0
    %1050 = vmatpush.bf16.msra.mxu0 0
    %1051 = vmatpush.bf16.msra.mxu0 0
    %1052 = vmatpush.bf16.msra.mxu0 0
    %1053 = vmatpush.bf16.msra.mxu0 %v1044
    %1054 = vmatpush.bf16.msra.mxu0 %v1043
    %1055 = vmatmul.bf16.gmra.mxu0 %v798
    %v1056 = vpop.f32.mrf.mxu0
    %v1057 = vadd.f32 %v1033, %v1056
    %v1058 = vpop.f32.mrf.mxu0
    %v1059 = vadd.f32 %v1033, %v1058
    %1060 = vdwg.mxu0
    %v1061 = vpack.c.bf16 %v987, %v985
    %v1062 = vpack.c.bf16 %v1023, %v1021
    %v1064 = vsel %vm258, %v1061, 0
    %v1067 = vsel %vm258, %v1062, 0
    %1069 = vmatpush.bf16.xpose.msra.mxu0 0
    %1070 = vmatpush.bf16.xpose.msra.mxu0 0
    %1071 = vmatpush.bf16.xpose.msra.mxu0 0
    %1072 = vmatpush.bf16.xpose.msra.mxu0 0
    %1073 = vmatpush.bf16.xpose.msra.mxu0 0
    %1074 = vmatpush.bf16.xpose.msra.mxu0 0
    %1075 = vmatpush.bf16.xpose.msra.mxu0 0
    %1076 = vmatpush.bf16.xpose.msra.mxu0 %v1067
    %1077 = vmatmul.bf16.gmra.mxu0 %v1064
    %v1078 = vpop.f32.mrf.mxu0
    %v1079 = vadd.f32 0.0, %v1078
    %v1080 = vpop.f32.mrf.mxu0
    %v1081 = vadd.f32 0.0, %v1080
    %1082 = vdwg.mxu0
    %v1083 = vmul.f32 %v1079, 0.25
    %v1084 = vmul.f32 %v1081, 0.25
    %v1085 = vadd.f32 %v1083, %v148
    %v1086 = vadd.f32 %v1084, %v149
    %v1087 = vsel %vm258, %v1085, -inf
    %1088 = vmax.xlane.f32.xlu0 %v1087
    %v1089 = vpop.xlane.xlu0 %1088
    %v1090 = vsel %vm258, %v1086, -inf
    %1091 = vmax.xlane.f32.xlu0 %v1090
    %v1092 = vpop.xlane.xlu0 %1091
    %v1093 = vsub.f32 %v1085, %v1089
    %v1094 = vsub.f32 %v1086, %v1092
    %v1095 = vmul.f32 %v1093, 1.442695
    %v1096 = vpow.pop %v1095
    %v1097 = vmul.f32 %v1094, 1.442695
    %v1098 = vpow.pop %v1097
    %v1099 = vsel %vm258, %v1096, 0.0
    %1100 = vadd.xlane.f32.xlu0 %v1099
    %v1101 = vpop.xlane.xlu0 %1100
    %v1102 = vsel %vm258, %v1098, 0.0
    %1103 = vadd.xlane.f32.xlu0 %v1102
    %v1104 = vpop.xlane.xlu0 %1103
    %v1105 = vrcp.pop %v1101
    %v1106 = vrcp.pop %v1104
    %v1107 = vmul.f32 %v1096, %v1105
    %v1108 = vmul.f32 %v1098, %v1106
    %v1109 = vpack.c.bf16 %v1108, %v1107
    %v1110 = vpack.c.bf16 %v1059, %v1057
    %v1112 = vsel %vm258, %v1109, 0
    %1114 = vmatpush.bf16.msra.mxu0 0
    %1115 = vmatpush.bf16.msra.mxu0 0
    %1116 = vmatpush.bf16.msra.mxu0 0
    %1117 = vmatpush.bf16.msra.mxu0 0
    %1118 = vmatpush.bf16.msra.mxu0 0
    %1119 = vmatpush.bf16.msra.mxu0 0
    %1120 = vmatpush.bf16.msra.mxu0 0
    %1121 = vmatpush.bf16.msra.mxu0 %v1110
    %1122 = vmatmul.bf16.gmra.mxu0 %v1112
    %v1123 = vpop.f32.mrf.mxu0
    %v1124 = vadd.f32 0.0, %v1123
    %v1125 = vpop.f32.mrf.mxu0
    %v1126 = vadd.f32 0.0, %v1125
    %1127 = vdwg.mxu0
    %1130 = vrot.lane.b32.xlu0 %v1124, 16
    %v1131 = vpop.permute.xlu0 %1130
    %1132 = vrot.lane.b32.xlu0 %v1126, 16
    %v1133 = vpop.permute.xlu0 %1132
    %v1136 = vsel %vm258, %v949, %v1131
    %v1137 = vsel %vm258, %v951, %v1133
    %v1138 = vpack.c.bf16 %v1137, %v1136
    %s1139 = scalar_lea.vmem %s10, 16
    %v1140 = vld [vmem:[%s1139] sm:$0xf]
    %v1141 = vld [vmem:[%s1139 + $0x4] sm:$0xf]
    %v1142 = vld [vmem:[%s1139 + $0x8] sm:$0xf]
    %v1143 = vld [vmem:[%s1139 + $0xc] sm:$0xf]
    %s1144 = scalar_lea.vmem %s11, 1
    %v1145 = vld [vmem:[%s1144] sm:$0x1]
    %v1147 = vperm.slane %v1145, 0
    %v1153 = vunpack.c.l.b16 %v1140
    %v1154 = vunpack.c.l.b16 %v1141
    %v1155 = vunpack.c.l.b16 %v1142
    %v1156 = vunpack.c.l.b16 %v1143
    %v1157 = vpack.c.b16 %v1154, %v1153
    %v1158 = vpack.c.b16 %v1156, %v1155
    %v1162 = vsel %vm86, %v1138, 0
    %1164 = vmatpush.bf16.msra.mxu0 0
    %1165 = vmatpush.bf16.msra.mxu0 0
    %1166 = vmatpush.bf16.msra.mxu0 0
    %1167 = vmatpush.bf16.msra.mxu0 0
    %1168 = vmatpush.bf16.msra.mxu0 0
    %1169 = vmatpush.bf16.msra.mxu0 0
    %1170 = vmatpush.bf16.msra.mxu0 %v1158
    %1171 = vmatpush.bf16.msra.mxu0 %v1157
    %1172 = vmatmul.bf16.gmra.mxu0 %v1162
    %v1173 = vpop.f32.mrf.mxu0
    %v1174 = vadd.f32 %v1147, %v1173
    %v1175 = vpop.f32.mrf.mxu0
    %v1176 = vadd.f32 %v1147, %v1175
    %1177 = vdwg.mxu0
    %v1178 = vadd.f32 %v772, %v1174
    %v1179 = vadd.f32 %v773, %v1176
    %s1180 = scalar_lea.vmem %s12, 1
    %v1181 = vld [vmem:[%s1180] sm:$0x1]
    %s1182 = scalar_lea.vmem %s13, 1
    %v1183 = vld [vmem:[%s1182] sm:$0x1]
    %v1184 = vsel %vm86, %v1178, 0.0
    %1185 = vadd.xlane.f32.xlu0 %v1184
    %v1186 = vpop.xlane.xlu0 %1185
    %v1187 = vsel %vm86, %v1179, 0.0
    %1188 = vadd.xlane.f32.xlu0 %v1187
    %v1189 = vpop.xlane.xlu0 %1188
    %v1190 = vmul.f32 %v1186, %v99
    %v1191 = vmul.f32 %v1189, %v99
    %v1192 = vsub.f32 %v1178, %v1190
    %v1193 = vsub.f32 %v1179, %v1191
    %v1194 = vmul.f32 %v1192, %v1192
    %v1195 = vmul.f32 %v1193, %v1193
    %v1196 = vsel %vm86, %v1194, 0.0
    %1197 = vadd.xlane.f32.xlu0 %v1196
    %v1198 = vpop.xlane.xlu0 %1197
    %v1199 = vsel %vm86, %v1195, 0.0
    %1200 = vadd.xlane.f32.xlu0 %v1199
    %v1201 = vpop.xlane.xlu0 %1200
    %v1202 = vmul.f32 %v1198, %v99
    %v1203 = vmul.f32 %v1201, %v99
    %v1204 = vadd.f32 %v1202, 1e-12
    %v1205 = vadd.f32 %v1203, 1e-12
    %v1206 = vrsqrt.pop %v1204
    %v1207 = vmul.f32 %v1206, %v1204
    %v1208 = vmul.f32 %v1207, %v1206
    %v1209 = vmul.f32 0.5, %v1208
    %v1210 = vsub.f32 1.5, %v1209
    %v1211 = vmul.f32 %v1206, %v1210
    %vm1212 = vweird.f32 %v1204
    %vm1213 = vweird.f32 %v1206
    %vm1214 = vmor %vm1212, %vm1213
    %v1215 = vsel %vm1214, %v1206, %v1211
    %v1216 = vrsqrt.pop %v1205
    %v1217 = vmul.f32 %v1216, %v1205
    %v1218 = vmul.f32 %v1217, %v1216
    %v1219 = vmul.f32 0.5, %v1218
    %v1220 = vsub.f32 1.5, %v1219
    %v1221 = vmul.f32 %v1216, %v1220
    %vm1222 = vweird.f32 %v1205
    %vm1223 = vweird.f32 %v1216
    %vm1224 = vmor %vm1222, %vm1223
    %v1225 = vsel %vm1224, %v1216, %v1221
    %v1226 = vmul.f32 %v1192, %v1215
    %v1227 = vmul.f32 %v1193, %v1225
    %v1229 = vperm.slane %v1181, 0
    %v1231 = vmul.f32 %v1226, %v1229
    %v1232 = vmul.f32 %v1227, %v1229
    %v1234 = vperm.slane %v1183, 0
    %v1236 = vadd.f32 %v1231, %v1234
    %v1237 = vadd.f32 %v1232, %v1234
    %v1238 = vpack.c.bf16 %v1237, %v1236
    %s1239 = scalar_lea.vmem %s14, 16
    %v1240 = vld [vmem:[%s1239] sm:$0xf]
    %v1241 = vld [vmem:[%s1239 + $0x4] sm:$0xf]
    %v1242 = vld [vmem:[%s1239 + $0x8] sm:$0xf]
    %v1243 = vld [vmem:[%s1239 + $0xc] sm:$0xf]
    %s1244 = scalar_lea.vmem %s15, 1
    %v1245 = vld [vmem:[%s1244] sm:$0x1]
    %v1247 = vperm.slane %v1245, 0
    %v1253 = vunpack.c.l.b16 %v1240
    %v1254 = vunpack.c.l.b16 %v1241
    %v1255 = vunpack.c.l.b16 %v1242
    %v1256 = vunpack.c.l.b16 %v1243
    %v1257 = vpack.c.b16 %v1254, %v1253
    %v1258 = vpack.c.b16 %v1256, %v1255
    %v1262 = vsel %vm86, %v1238, 0
    %1264 = vmatpush.bf16.msra.mxu0 0
    %1265 = vmatpush.bf16.msra.mxu0 0
    %1266 = vmatpush.bf16.msra.mxu0 0
    %1267 = vmatpush.bf16.msra.mxu0 0
    %1268 = vmatpush.bf16.msra.mxu0 0
    %1269 = vmatpush.bf16.msra.mxu0 0
    %1270 = vmatpush.bf16.msra.mxu0 %v1258
    %1271 = vmatpush.bf16.msra.mxu0 %v1257
    %1272 = vmatmul.bf16.gmra.mxu0 %v1262
    %v1273 = vpop.f32.mrf.mxu0
    %v1274 = vadd.f32 %v1247, %v1273
    %v1275 = vpop.f32.mrf.mxu0
    %v1276 = vadd.f32 %v1247, %v1275
    %1277 = vdwg.mxu0
    %v1278 = vmul.f32 %v1274, %v1274
    %v1279 = vmul.f32 %v1276, %v1276
    %v1280 = vmul.f32 %v1274, %v1278
    %v1281 = vmul.f32 %v1276, %v1279
    %v1282 = vmul.f32 %v1280, 0.044715
    %v1283 = vmul.f32 %v1281, 0.044715
    %v1284 = vadd.f32 %v1274, %v1282
    %v1285 = vadd.f32 %v1276, %v1283
    %v1286 = vmul.f32 %v1284, 0.7978846
    %v1287 = vmul.f32 %v1285, 0.7978846
    %v1288 = vtanh.pop %v1286
    %v1289 = vtanh.pop %v1287
    %v1290 = vadd.f32 %v1288, 1.0
    %v1291 = vadd.f32 %v1289, 1.0
    %v1292 = vmul.f32 %v1290, 0.5
    %v1293 = vmul.f32 %v1291, 0.5
    %v1294 = vmul.f32 %v1274, %v1292
    %v1295 = vmul.f32 %v1276, %v1293
    %v1296 = vpack.c.bf16 %v1295, %v1294
    %s1297 = scalar_lea.vmem %s16, 32
    %v1298 = vld [vmem:[%s1297] sm:$0xf]
    %v1299 = vld [vmem:[%s1297 + $0x4] sm:$0xf]
    %v1300 = vld [vmem:[%s1297 + $0x8] sm:$0xf]
    %v1301 = vld [vmem:[%s1297 + $0xc] sm:$0xf]
    %v1302 = vld [vmem:[%s1297 + $0x10] sm:$0xf]
    %v1303 = vld [vmem:[%s1297 + $0x14] sm:$0xf]
    %v1304 = vld [vmem:[%s1297 + $0x18] sm:$0xf]
    %v1305 = vld [vmem:[%s1297 + $0x1c] sm:$0xf]
    %s1306 = scalar_lea.vmem %s17, 1
    %v1307 = vld [vmem:[%s1306] sm:$0x1]
    %v1309 = vperm.slane %v1307, 0
    %v1319 = vunpack.c.l.b16 %v1298
    %v1320 = vunpack.c.l.b16 %v1299
    %v1321 = vunpack.c.l.b16 %v1300
    %v1322 = vunpack.c.l.b16 %v1301
    %v1323 = vunpack.c.l.b16 %v1302
    %v1324 = vunpack.c.l.b16 %v1303
    %v1325 = vunpack.c.l.b16 %v1304
    %v1326 = vunpack.c.l.b16 %v1305
    %v1327 = vpack.c.b16 %v1320, %v1319
    %v1328 = vpack.c.b16 %v1322, %v1321
    %v1329 = vpack.c.b16 %v1324, %v1323
    %v1330 = vpack.c.b16 %v1326, %v1325
    %v1336 = vsel %vm698, %v1296, 0
    %1338 = vmatpush.bf16.msra.mxu0 0
    %1339 = vmatpush.bf16.msra.mxu0 0
    %1340 = vmatpush.bf16.msra.mxu0 0
    %1341 = vmatpush.bf16.msra.mxu0 0
    %1342 = vmatpush.bf16.msra.mxu0 %v1330
    %1343 = vmatpush.bf16.msra.mxu0 %v1329
    %1344 = vmatpush.bf16.msra.mxu0 %v1328
    %1345 = vmatpush.bf16.msra.mxu0 %v1327
    %1346 = vmatmul.bf16.gmra.mxu0 %v1336
    %v1347 = vpop.f32.mrf.mxu0
    %v1348 = vadd.f32 %v1309, %v1347
    %v1349 = vpop.f32.mrf.mxu0
    %v1350 = vadd.f32 %v1309, %v1349
    %1351 = vdwg.mxu0
    %v1352 = vadd.f32 %v1236, %v1348
    %v1353 = vadd.f32 %v1237, %v1350
    %s1354 = scalar_lea.vmem %s18, 1
    %v1355 = vld [vmem:[%s1354] sm:$0x1]
    %s1356 = scalar_lea.vmem %s19, 1
    %v1357 = vld [vmem:[%s1356] sm:$0x1]
    %v1358 = vsel %vm86, %v1352, 0.0
    %1359 = vadd.xlane.f32.xlu0 %v1358
    %v1360 = vpop.xlane.xlu0 %1359
    %v1361 = vsel %vm86, %v1353, 0.0
    %1362 = vadd.xlane.f32.xlu0 %v1361
    %v1363 = vpop.xlane.xlu0 %1362
    %v1364 = vmul.f32 %v1360, %v99
    %v1365 = vmul.f32 %v1363, %v99
    %v1366 = vsub.f32 %v1352, %v1364
    %v1367 = vsub.f32 %v1353, %v1365
    %v1368 = vmul.f32 %v1366, %v1366
    %v1369 = vmul.f32 %v1367, %v1367
    %v1370 = vsel %vm86, %v1368, 0.0
    %1371 = vadd.xlane.f32.xlu0 %v1370
    %v1372 = vpop.xlane.xlu0 %1371
    %v1373 = vsel %vm86, %v1369, 0.0
    %1374 = vadd.xlane.f32.xlu0 %v1373
    %v1375 = vpop.xlane.xlu0 %1374
    %v1376 = vmul.f32 %v1372, %v99
    %v1377 = vmul.f32 %v1375, %v99
    %v1378 = vadd.f32 %v1376, 1e-12
    %v1379 = vadd.f32 %v1377, 1e-12
    %v1380 = vrsqrt.pop %v1378
    %v1381 = vmul.f32 %v1380, %v1378
    %v1382 = vmul.f32 %v1381, %v1380
    %v1383 = vmul.f32 0.5, %v1382
    %v1384 = vsub.f32 1.5, %v1383
    %v1385 = vmul.f32 %v1380, %v1384
    %vm1386 = vweird.f32 %v1378
    %vm1387 = vweird.f32 %v1380
    %vm1388 = vmor %vm1386, %vm1387
    %v1389 = vsel %vm1388, %v1380, %v1385
    %v1390 = vrsqrt.pop %v1379
    %v1391 = vmul.f32 %v1390, %v1379
    %v1392 = vmul.f32 %v1391, %v1390
    %v1393 = vmul.f32 0.5, %v1392
    %v1394 = vsub.f32 1.5, %v1393
    %v1395 = vmul.f32 %v1390, %v1394
    %vm1396 = vweird.f32 %v1379
    %vm1397 = vweird.f32 %v1390
    %vm1398 = vmor %vm1396, %vm1397
    %v1399 = vsel %vm1398, %v1390, %v1395
    %v1400 = vmul.f32 %v1366, %v1389
    %v1401 = vmul.f32 %v1367, %v1399
    %v1403 = vperm.slane %v1355, 0
    %v1405 = vmul.f32 %v1400, %v1403
    %v1406 = vmul.f32 %v1401, %v1403
    %v1408 = vperm.slane %v1357, 0
    %v1410 = vadd.f32 %v1405, %v1408
    %v1411 = vadd.f32 %v1406, %v1408
    %v1413 = vrot.slane %v1411, 7
    %vm1415 = vcmask 1040384
    %v1416 = vsel %vm1415, %v1410, %v1413
    %v1417 = vpack.c.bf16 %v1416, %v1416
    %v1418 = vld [vmem:[%s20] sm:$0xf]
    %v1419 = vld [vmem:[%s20 + $0x4] sm:$0xf]
    %v1420 = vld [vmem:[%s20 + $0x8] sm:$0xf]
    %v1421 = vld [vmem:[%s20 + $0xc] sm:$0xf]
    %v1422 = vld [vmem:[%s21] sm:$0x1]
    %v1424 = vperm.slane %v1422, 0
    %v1430 = vunpack.c.l.b16 %v1418
    %v1431 = vunpack.c.l.b16 %v1419
    %v1432 = vunpack.c.l.b16 %v1420
    %v1433 = vunpack.c.l.b16 %v1421
    %v1434 = vpack.c.b16 %v1431, %v1430
    %v1435 = vpack.c.b16 %v1433, %v1432
    %v1439 = vsel %vm86, %v1417, 0
    %1441 = vmatpush.bf16.msra.mxu0 0
    %1442 = vmatpush.bf16.msra.mxu0 0
    %1443 = vmatpush.bf16.msra.mxu0 0
    %1444 = vmatpush.bf16.msra.mxu0 0
    %1445 = vmatpush.bf16.msra.mxu0 0
    %1446 = vmatpush.bf16.msra.mxu0 0
    %1447 = vmatpush.bf16.msra.mxu0 %v1435
    %1448 = vmatpush.bf16.msra.mxu0 %v1434
    %1449 = vmatmul.bf16.gmra.mxu0 %v1439
    %v1450 = vpop.f32.mrf.mxu0
    %v1451 = vadd.f32 %v1424, %v1450
    %v1452 = vpop.f32.mrf.mxu0
    %1453 = vdwg.mxu0
    %v1454 = vtanh.pop %v1451
    %v1455 = vpack.c.bf16 %v1454, %v1454
    %v1456 = vld [vmem:[%s22] sm:$0xf]
    %v1457 = vld [vmem:[%s22 + $0x4] sm:$0xf]
    %v1458 = vld [vmem:[%s22 + $0x8] sm:$0xf]
    %v1459 = vld [vmem:[%s22 + $0xc] sm:$0xf]
    %v1460 = vld [vmem:[%s23] sm:$0x1]
    %v1462 = vperm.slane %v1460, 0
    %v1468 = vunpack.c.l.b16 %v1456
    %v1469 = vunpack.c.l.b16 %v1457
    %v1470 = vunpack.c.l.b16 %v1458
    %v1471 = vunpack.c.l.b16 %v1459
    %v1472 = vpack.c.b16 %v1469, %v1468
    %v1473 = vpack.c.b16 %v1471, %v1470
    %v1477 = vsel %vm86, %v1455, 0
    %1479 = vmatpush.bf16.msra.mxu0 0
    %1480 = vmatpush.bf16.msra.mxu0 0
    %1481 = vmatpush.bf16.msra.mxu0 0
    %1482 = vmatpush.bf16.msra.mxu0 0
    %1483 = vmatpush.bf16.msra.mxu0 0
    %1484 = vmatpush.bf16.msra.mxu0 0
    %1485 = vmatpush.bf16.msra.mxu0 %v1473
    %1486 = vmatpush.bf16.msra.mxu0 %v1472
    %1487 = vmatmul.bf16.gmra.mxu0 %v1477
    %v1488 = vpop.f32.mrf.mxu0
    %v1489 = vadd.f32 %v1462, %v1488
    %v1490 = vpop.f32.mrf.mxu0
    %1491 = vdwg.mxu0
    %vm1492 = vcmask 58368
    %1493 = vst.msk [vmem:[#allocation2] sm:$0x3] %vm1492, %v1489
    %v1494 = vsel %vm1492, %v1489, -inf
    %1495 = vmax.xlane.f32.xlu0 %v1494
    %v1496 = vpop.xlane.xlu0 %1495
    %v1497 = vsub.f32 %v1489, %v1496
    %v1498 = vmul.f32 %v1497, 1.442695
    %v1499 = vpow.pop %v1498
    %v1500 = vsel %vm1492, %v1499, 0.0
    %1501 = vadd.xlane.f32.xlu0 %v1500
    %v1502 = vpop.xlane.xlu0 %1501
    %v1503 = vrcp.pop %v1502
    %v1504 = vmul.f32 %v1499, %v1503
    %1505 = vst.msk [vmem:[#allocation4] sm:$0x3] %vm1492, %v1504
    // Predicated region
    $region98: #{tpu_custom_call.1} parent=1 // pred_check
      _
    $region99: #{tpu_custom_call.1} parent=1 // pred_check_branch
      %1507 = sbr.rel (0) target = $region101
    $region100: #{tpu_custom_call.1} parent=1 // pred_region
      %1509 = vsyncadd [#allocation3], 0
      %s1511 = sshll.u32 [#allocation2], 4
      %s1512 = int_to_ptr.vmem [resolvable:$true] %s1511
      %s1513 = sshll.u32 %s24, 4
      %s1514 = int_to_ptr.hbm [resolvable:$true] %s1513
      %1516 = dma.vmem_to_hbm [thread:$0]  %s1512, 32, %s1514, [#allocation3]
    $region101: #{tpu_custom_call.1} parent=1 // pred_fallthru
      _
    // Predicated region
    $region102: #{tpu_custom_call.1} parent=1 // pred_check
      _
    $region103: #{tpu_custom_call.1} parent=1 // pred_check_branch
      %1518 = sbr.rel (0) target = $region105
    $region104: #{tpu_custom_call.1} parent=1 // pred_region
      %1520 = vsyncadd [#allocation5], 0
      %s1522 = sshll.u32 [#allocation4], 4
      %s1523 = int_to_ptr.vmem [resolvable:$true] %s1522
      %s1524 = sshll.u32 %s25, 4
      %s1525 = int_to_ptr.hbm [resolvable:$true] %s1524
      %1527 = dma.vmem_to_hbm [thread:$0]  %s1523, 32, %s1525, [#allocation5]
    $region105: #{tpu_custom_call.1} parent=1 // pred_fallthru
      _
    // Predicated region
    $region106: #{tpu_custom_call.1} parent=1 // pred_check
      _
    $region107: #{tpu_custom_call.1} parent=1 // pred_check_branch
      %1529 = sbr.rel (0) target = $region109
    $region108: #{tpu_custom_call.1} parent=1 // pred_region
      %1531 = dma.done [#allocation3], 32
    $region109: #{tpu_custom_call.1} parent=1 // pred_fallthru
      _
    // Predicated region
    $region110: #{tpu_custom_call.1} parent=1 // pred_check
      _
    $region111: #{tpu_custom_call.1} parent=1 // pred_check_branch
      %1533 = sbr.rel (0) target = $region113
    $region112: #{tpu_custom_call.1} parent=1 // pred_region
      %1535 = dma.done [#allocation5], 32
    $region113: #{tpu_custom_call.1} parent=1 // pred_fallthru
      _
    %1536 = vsyncpa [#allocation3], 1
    %1537 = vsyncpa [#allocation5], 1

</llo_original>
